<compile_context>
chip_gen: v6e
topology: v6e:2x2x1
jax: 0.10.0
libtpu: 0.0.40
codegen_flags: <defaults>
</compile_context>

<pallas_src>
import functools
import math

import numpy as np
import jax
import jax.numpy as jnp
from jax import lax
from jax.experimental import pallas as pl
from jax.experimental.pallas import tpu as pltpu


# ----------------------------------------------------------------------------
# small utils
# ----------------------------------------------------------------------------
def _round_up(x, m):
    return (x + m - 1) // m * m


def _apply_act(y, act):
    if act == "leaky":
        return jnp.where(y >= 0.0, y, 0.1 * y)   # nn.LeakyReLU(0.1) in the spec
    if act == "relu":
        return jnp.maximum(y, 0.0)
    if act == "gelu":
        # TODO(synk): tanh-approx GELU (maps to EUP) instead of exact erf GELU.
        c = 0.7978845608028654  # sqrt(2/pi)
        return 0.5 * y * (1.0 + jnp.tanh(c * (y + 0.044715 * y * y * y)))
    return y


@functools.lru_cache(maxsize=None)
def _vmem_limit():
    """Generation-aware scoped-VMEM request (v5e/v6e: 48 MiB, v7x: ~28 MiB)."""
    cap = 128 * 1024 * 1024
    try:
        info = pltpu.get_tpu_info()
        cap = int(getattr(info, "vmem_capacity_bytes", cap) or cap)
    except Exception:
        pass
    return int(max(16 << 20, min(cap // 2 - (4 << 20), 48 << 20)))


# ----------------------------------------------------------------------------
# Pallas kernel 1: tiled matmul, bf16 operands, f32 MXU accumulate,
#   out = act((A @ B) * scale + bias [+ residual])
# Single-K-step variant (the common case here): no scratch, no pl.when.
# ----------------------------------------------------------------------------
@functools.lru_cache(maxsize=None)
def _matmul_call_k1(Mp, Kp, Np, act, has_res, out_dtype_name, tm, tn):
    out_dtype = jnp.dtype(out_dtype_name)

    def kernel(*refs):
        a_ref, b_ref, s_ref, c_ref = refs[0], refs[1], refs[2], refs[3]
        r_ref = refs[4] if has_res else None
        o_ref = refs[-1]
        y = jnp.dot(a_ref[...], b_ref[...], preferred_element_type=jnp.float32)
        y = y * s_ref[...] + c_ref[...]
        if has_res:
            y = y + r_ref[...].astype(jnp.float32)
        o_ref[...] = _apply_act(y, act).astype(o_ref.dtype)

    in_specs = [
        pl.BlockSpec((tm, Kp), lambda i, j: (i, 0)),
        pl.BlockSpec((Kp, tn), lambda i, j: (0, j)),
        pl.BlockSpec((1, tn), lambda i, j: (0, j)),
        pl.BlockSpec((1, tn), lambda i, j: (0, j)),
    ]
    if has_res:
        in_specs.append(pl.BlockSpec((tm, tn), lambda i, j: (i, j)))
    fn = pl.pallas_call(
        kernel,
        out_shape=jax.ShapeDtypeStruct((Mp, Np), out_dtype),
        grid_spec=pltpu.PrefetchScalarGridSpec(
            num_scalar_prefetch=0,
            grid=(Mp // tm, Np // tn),
            in_specs=in_specs,
            out_specs=pl.BlockSpec((tm, tn), lambda i, j: (i, j)),
        ),
        compiler_params=pltpu.CompilerParams(
            dimension_semantics=("parallel", "parallel"),
            vmem_limit_bytes=_vmem_limit(),
        ),
    )
    return jax.jit(fn)


# Multi-K-step fallback (only used if K is padded above 4096).
def _make_matmul_kernel(act, has_res):
    def kernel(*refs):
        a_ref, b_ref, s_ref, c_ref = refs[0], refs[1], refs[2], refs[3]
        r_ref = refs[4] if has_res else None
        o_ref, acc_ref = refs[-2], refs[-1]

        @pl.when(pl.program_id(2) == 0)
        def _():
            acc_ref[...] = jnp.zeros_like(acc_ref)

        acc_ref[...] += jnp.dot(a_ref[...], b_ref[...],
                                preferred_element_type=jnp.float32)

        @pl.when(pl.program_id(2) == pl.num_programs(2) - 1)
        def _():
            y = acc_ref[...] * s_ref[...] + c_ref[...]
            if has_res:
                y = y + r_ref[...].astype(jnp.float32)
            o_ref[...] = _apply_act(y, act).astype(o_ref.dtype)

    return kernel


@functools.lru_cache(maxsize=None)
def _matmul_call_multik(Mp, Kp, Np, act, has_res, out_dtype_name, tm, tn, tk):
    out_dtype = jnp.dtype(out_dtype_name)
    in_specs = [
        pl.BlockSpec((tm, tk), lambda i, j, k: (i, k)),
        pl.BlockSpec((tk, tn), lambda i, j, k: (k, j)),
        pl.BlockSpec((1, tn), lambda i, j, k: (0, j)),
        pl.BlockSpec((1, tn), lambda i, j, k: (0, j)),
    ]
    if has_res:
        in_specs.append(pl.BlockSpec((tm, tn), lambda i, j, k: (i, j)))
    fn = pl.pallas_call(
        _make_matmul_kernel(act, has_res),
        out_shape=jax.ShapeDtypeStruct((Mp, Np), out_dtype),
        grid_spec=pltpu.PrefetchScalarGridSpec(
            num_scalar_prefetch=0,
            grid=(Mp // tm, Np // tn, Kp // tk),
            in_specs=in_specs,
            out_specs=pl.BlockSpec((tm, tn), lambda i, j, k: (i, j)),
            scratch_shapes=[pltpu.VMEM((tm, tn), jnp.float32)],
        ),
        compiler_params=pltpu.CompilerParams(
            dimension_semantics=("parallel", "parallel", "arbitrary"),
            vmem_limit_bytes=_vmem_limit(),
        ),
    )
    return jax.jit(fn)


def _pick_tm(M):
    if M >= 2048:
        return 512
    if M >= 1024:
        return 256
    return 128


def matmul(a, b, scale=None, bias=None, act="none", residual=None,
           out_dtype=jnp.float32):
    M, K = a.shape
    K2, N = b.shape
    assert K == K2

    s = jnp.ones((N,), jnp.float32) if scale is None else scale.astype(jnp.float32)
    c = jnp.zeros((N,), jnp.float32) if bias is None else bias.astype(jnp.float32)

    # Tiny GEMMs (temporal transformer, final fc): XLA beats padded Pallas tiles.
    if M < 512 or N < 64 or K < 16:
        y = jnp.dot(a.astype(jnp.float32), b.astype(jnp.float32),
                    preferred_element_type=jnp.float32)
        y = y * s[None, :] + c[None, :]
        if residual is not None:
            y = y + residual.astype(jnp.float32)
        return _apply_act(y, act).astype(out_dtype)

    a = a.astype(jnp.bfloat16)
    b = b.astype(jnp.bfloat16)

    tm = _pick_tm(M)
    tn = 256 if N % 256 == 0 else 128
    Kp = _round_up(K, 16)
    if Kp > 4096:
        tk = 2048
        Kp = _round_up(K, tk)
    else:
        tk = Kp
    Mp, Np = _round_up(M, tm), _round_up(N, tn)

    if (Mp, Kp) != (M, K):
        a = jnp.pad(a, ((0, Mp - M), (0, Kp - K)))
    if (Kp, Np) != (K, N):
        b = jnp.pad(b, ((0, Kp - K), (0, Np - N)))
    s = jnp.pad(s, (0, Np - N)).reshape(1, Np)
    c = jnp.pad(c, (0, Np - N)).reshape(1, Np)

    args = [a, b, s, c]
    has_res = residual is not None
    if has_res:
        r = residual.astype(jnp.bfloat16)
        if (Mp, Np) != (M, N):
            r = jnp.pad(r, ((0, Mp - M), (0, Np - N)))
        args.append(r)

    name = jnp.dtype(out_dtype).name
    if tk == Kp:
        out = _matmul_call_k1(Mp, Kp, Np, act, has_res, name, tm, tn)(*args)
    else:
        out = _matmul_call_multik(Mp, Kp, Np, act, has_res, name, tm, tn, tk)(*args)
    return out[:M, :N]


# ----------------------------------------------------------------------------
# Pallas kernel 2: stride-1 3x3x3 conv, M-tiled over padded depth-slices.
# The flat padded activation is passed 4 times (main tile + 3 one-slice halos);
# the W-axis 3-tap concat is built in VMEM; 9 (d,h) taps of K=3C accumulate
# into an f32 scratch; BN affine + activation fused in the epilogue.
# ----------------------------------------------------------------------------
def _tap_vmem_est(G, S, C, Cout, Wp):
    n_main = G * S
    Nx = n_main + 2 * S + 2 * Wp
    c3p = _round_up(3 * C, 128)
    return (2 * n_main * C * 2          # main input blocks (double-buffered)
            + 2 * 3 * S * C * 2         # halo blocks
            + 2 * 27 * C * Cout * 2     # weights
            + 2 * n_main * Cout * 2     # output blocks (bf16)
            + (n_main + 3 * S) * C * 4  # f32 staging buffer
            + Nx * c3p * 2              # bf16 x3 buffer
            + 2 * n_main * Cout * 4)    # f32 accumulator + dot temporary


def _tap_plan(B, D, H, W, C, Cout):
    Hp = H + 2
    Wp = _round_up(W + 2, 16)
    S = Hp * Wp
    total = B * (D + 2)
    g_in = max(3, (2 << 20) // (S * C * 2))
    g_acc = max(3, (4 << 20) // (S * Cout * 4))
    G = max(3, min(g_in, g_acc, 32, max(3, (total + 1) // 2)))
    budget = _vmem_limit() - (6 << 20)
    while G > 3 and _tap_vmem_est(G, S, C, Cout, Wp) > budget:
        G -= 1
    fits = _tap_vmem_est(G, S, C, Cout, Wp) <= budget
    nG = -(-total // G)
    return G, nG, S, Hp, Wp, total, fits


@functools.lru_cache(maxsize=None)
def _tapconv_call(G, nG, S, Hp, Wp, C, Cout, act, out_dtype_name):
    out_dtype = jnp.dtype(out_dtype_name)
    C3 = 3 * C
    n_main = G * S
    n_buf = n_main + 3 * S
    Nx = n_main + 2 * S + 2 * Wp        # covers the largest tap offset exactly

    def kernel(xm_ref, h0_ref, h1_ref, h2_ref, w_ref, s_ref, c_ref, o_ref,
               buf_ref, x3_ref, acc_ref):
        # Assemble main tile + 3 halo depth-slices into one contiguous buffer
        # (f32 staging: sublane-aligned copies, robust shifted reads below).
        buf_ref[0:n_main, :] = xm_ref[...].astype(jnp.float32)
        buf_ref[n_main:n_main + S, :] = h0_ref[...].astype(jnp.float32)
        buf_ref[n_main + S:n_main + 2 * S, :] = h1_ref[...].astype(jnp.float32)
        buf_ref[n_main + 2 * S:n_main + 3 * S, :] = h2_ref[...].astype(jnp.float32)
        # Build the W-axis 3-tap concat in VMEM (replaces the old HBM concat).
        x3_ref[:, 0:C] = buf_ref[0:Nx, :].astype(jnp.bfloat16)
        x3_ref[:, C:2 * C] = buf_ref[1:Nx + 1, :].astype(jnp.bfloat16)
        x3_ref[:, 2 * C:3 * C] = buf_ref[2:Nx + 2, :].astype(jnp.bfloat16)
        # 9 (d,h) taps, each a K=3C matmul with 16-aligned row offsets.
        for t in range(9):
            a, b = divmod(t, 3)
            off = (a * Hp + b) * Wp
            contrib = jnp.dot(x3_ref[off:off + n_main, :],
                              w_ref[t * C3:(t + 1) * C3, :],
                              preferred_element_type=jnp.float32)
            if t == 0:
                acc_ref[...] = contrib
            else:
                acc_ref[...] += contrib
        y = acc_ref[...] * s_ref[...] + c_ref[...]
        o_ref[...] = _apply_act(y, act).astype(o_ref.dtype)

    fn = pl.pallas_call(
        kernel,
        out_shape=jax.ShapeDtypeStruct((nG * n_main, Cout), out_dtype),
        grid_spec=pltpu.PrefetchScalarGridSpec(
            num_scalar_prefetch=0,
            grid=(nG,),
            in_specs=[
                pl.BlockSpec((n_main, C), lambda i: (i, 0)),           # main tile
                pl.BlockSpec((S, C), lambda i: (i * G + G, 0)),        # halo slice 0
                pl.BlockSpec((S, C), lambda i: (i * G + G + 1, 0)),    # halo slice 1
                pl.BlockSpec((S, C), lambda i: (i * G + G + 2, 0)),    # halo slice 2
                pl.BlockSpec((27 * C, Cout), lambda i: (0, 0)),        # weights
                pl.BlockSpec((1, Cout), lambda i: (0, 0)),             # scale
                pl.BlockSpec((1, Cout), lambda i: (0, 0)),             # bias
            ],
            out_specs=pl.BlockSpec((n_main, Cout), lambda i: (i, 0)),
            scratch_shapes=[
                pltpu.VMEM((n_buf, C), jnp.float32),
                pltpu.VMEM((Nx, C3), jnp.bfloat16),
                pltpu.VMEM((n_main, Cout), jnp.float32),
            ],
        ),
        compiler_params=pltpu.CompilerParams(
            dimension_semantics=("parallel",),
            vmem_limit_bytes=_vmem_limit(),
        ),
    )
    return jax.jit(fn)


def conv3d_3x3x3_s1(x, w, scale, bias, act, out_dtype, plan):
    B, D, H, W, C = x.shape
    Cout = w.shape[0]
    G, nG, S, Hp, Wp, total, _ = plan

    xpad = jnp.pad(x.astype(jnp.bfloat16),
                   ((0, 0), (1, 1), (1, 1), (1, Wp - W - 1), (0, 0)))
    flat = xpad.reshape(total * S, C)
    # Pad tail with zero depth-slices so main + halo block indices stay in bounds.
    extra = ((nG + 1) * G - total) * S
    flat = jnp.pad(flat, ((0, extra), (0, 0)))

    w_mat = jnp.transpose(w, (2, 3, 4, 1, 0)).reshape(27 * C, Cout).astype(jnp.bfloat16)
    s = (jnp.ones((Cout,), jnp.float32) if scale is None
         else scale.astype(jnp.float32)).reshape(1, Cout)
    c = (jnp.zeros((Cout,), jnp.float32) if bias is None
         else bias.astype(jnp.float32)).reshape(1, Cout)

    out = _tapconv_call(G, nG, S, Hp, Wp, C, Cout, act,
                        jnp.dtype(out_dtype).name)(flat, flat, flat, flat,
                                                   w_mat, s, c)
    out = out[: total * S]
    out = out.reshape(B, D + 2, Hp, Wp, Cout)[:, :D, :H, :W, :]
    return out


# ----------------------------------------------------------------------------
# Pallas kernel 3: LayerNorm over the last (feature) axis
# ----------------------------------------------------------------------------
def _layernorm_kernel(x_ref, g_ref, b_ref, o_ref):
    x = x_ref[...]
    mean = jnp.mean(x, axis=-1, keepdims=True)
    var = jnp.mean(jnp.square(x - mean), axis=-1, keepdims=True)
    y = (x - mean) * lax.rsqrt(var + 1e-5)
    o_ref[...] = y * g_ref[...] + b_ref[...]


@functools.lru_cache(maxsize=None)
def _layernorm_call(Mp, C, tm):
    fn = pl.pallas_call(
        _layernorm_kernel,
        out_shape=jax.ShapeDtypeStruct((Mp, C), jnp.float32),
        grid_spec=pltpu.PrefetchScalarGridSpec(
            num_scalar_prefetch=0,
            grid=(Mp // tm,),
            in_specs=[pl.BlockSpec((tm, C), lambda i: (i, 0)),
                      pl.BlockSpec((1, C), lambda i: (0, 0)),
                      pl.BlockSpec((1, C), lambda i: (0, 0))],
            out_specs=pl.BlockSpec((tm, C), lambda i: (i, 0)),
        ),
        compiler_params=pltpu.CompilerParams(dimension_semantics=("parallel",)),
    )
    return jax.jit(fn)


def layernorm(x, gamma, beta, tm=128):
    M, C = x.shape
    if M < 256:      # tiny rows (temporal transformer): plain XLA
        xf = x.astype(jnp.float32)
        mean = jnp.mean(xf, axis=-1, keepdims=True)
        var = jnp.mean(jnp.square(xf - mean), axis=-1, keepdims=True)
        return (xf - mean) * lax.rsqrt(var + 1e-5) * gamma[None, :] + beta[None, :]
    Mp = _round_up(M, tm)
    x_p = jnp.pad(x.astype(jnp.float32), ((0, Mp - M), (0, 0)))
    g = gamma.reshape(1, C).astype(jnp.float32)
    b = beta.reshape(1, C).astype(jnp.float32)
    out = _layernorm_call(Mp, C, tm)(x_p, g, b)
    return out[:M]


# ----------------------------------------------------------------------------
# 3D convolution dispatch: 1x1x1 -> matmul, stride-1 3x3x3 -> tap kernel,
# otherwise bf16 im2col + Pallas matmul (BN affine + activation [+res] fused).
# ----------------------------------------------------------------------------
def im2col3d(x, ksize, stride, pad):
    # TODO(synk): use lax.conv_general_dilated_patches / a strided tap kernel to
    # avoid materialising the patches for the stem and the stride-2 conv.
    kd, kh, kw = ksize
    sd, sh, sw = stride
    pd, ph, pw = pad
    x = x.astype(jnp.bfloat16)
    B, D, H, W, C = x.shape
    xp = jnp.pad(x, ((0, 0), (pd, pd), (ph, ph), (pw, pw), (0, 0)))
    Do = (D + 2 * pd - kd) // sd + 1
    Ho = (H + 2 * ph - kh) // sh + 1
    Wo = (W + 2 * pw - kw) // sw + 1
    slices = []
    for a in range(kd):
        for b in range(kh):
            for c in range(kw):
                slices.append(
                    xp[:, a:a + sd * Do:sd, b:b + sh * Ho:sh, c:c + sw * Wo:sw, :])
    cols = jnp.stack(slices, axis=4)                 # (B, Do, Ho, Wo, K, C)
    cols = cols.reshape(B * Do * Ho * Wo, kd * kh * kw * C)
    return cols, (B, Do, Ho, Wo)


def conv3d(x, w, *, stride, padding, scale=None, bias=None, act="none",
           residual=None, out_dtype=jnp.bfloat16):
    # w: torch layout (Cout, Cin, kd, kh, kw)
    Cout, Cin = w.shape[0], w.shape[1]
    ksize = tuple(w.shape[2:])
    B, D, H, W, C = x.shape

    if ksize == (1, 1, 1):
        sd, sh, sw = stride
        xs = x if stride == (1, 1, 1) else x[:, ::sd, ::sh, ::sw, :]
        Bo, Do, Ho, Wo, _ = xs.shape
        w_mat = w.reshape(Cout, Cin).T
        res = None if residual is None else residual.reshape(-1, Cout)
        out = matmul(xs.reshape(-1, C), w_mat, scale=scale, bias=bias, act=act,
                     residual=res, out_dtype=out_dtype)
        return out.reshape(Bo, Do, Ho, Wo, Cout)

    if (ksize == (3, 3, 3) and stride == (1, 1, 1) and padding == (1, 1, 1)
            and residual is None and C % 8 == 0 and Cout % 8 == 0):
        plan = _tap_plan(B, D, H, W, C, Cout)
        if plan[-1]:
            return conv3d_3x3x3_s1(x, w, scale, bias, act, out_dtype, plan)

    cols, (Bo, Do, Ho, Wo) = im2col3d(x, ksize, stride, padding)
    w_mat = jnp.transpose(w, (2, 3, 4, 1, 0)).reshape(-1, Cout)
    res = None if residual is None else residual.reshape(-1, Cout)
    out = matmul(cols, w_mat, scale=scale, bias=bias, act=act,
                 residual=res, out_dtype=out_dtype)
    return out.reshape(Bo, Do, Ho, Wo, Cout)


def bn_fold(bn):
    scale = bn["gamma"] / jnp.sqrt(bn["var"] + 1e-5)
    bias = bn["beta"] - bn["mean"] * scale
    return scale, bias


# ----------------------------------------------------------------------------
# ResNet (3D)
# ----------------------------------------------------------------------------
def bottleneck(x, p, stride):
    if "down_w" in p:
        s, b = bn_fold(p["down_bn"])
        identity = conv3d(x, p["down_w"], stride=(stride,) * 3, padding=(0, 0, 0),
                          scale=s, bias=b, act="none", out_dtype=jnp.bfloat16)
    else:
        identity = x
    s1, b1 = bn_fold(p["bn1"])
    s2, b2 = bn_fold(p["bn2"])
    s3, b3 = bn_fold(p["bn3"])
    # NOTE: the reference Bottleneck.forward applies NO activation after bn2.
    y = conv3d(x, p["w1"], stride=(1, 1, 1), padding=(0, 0, 0),
               scale=s1, bias=b1, act="leaky", out_dtype=jnp.bfloat16)
    y = conv3d(y, p["w2"], stride=(stride,) * 3, padding=(1, 1, 1),
               scale=s2, bias=b2, act="none", out_dtype=jnp.bfloat16)
    # conv3 + bn3 + residual add + LeakyReLU fused in one Pallas matmul epilogue
    out = conv3d(y, p["w3"], stride=(1, 1, 1), padding=(0, 0, 0),
                 scale=s3, bias=b3, act="leaky", residual=identity,
                 out_dtype=jnp.bfloat16)
    return out


def resnet_forward(x, p):
    s, b = bn_fold(p["bn1"])
    y = conv3d(x, p["conv1_w"], stride=(1, 2, 2), padding=(1, 3, 3),
               scale=s, bias=b, act="leaky", out_dtype=jnp.bfloat16)
    # MaxPool3d(kernel=3, stride=(1,2,2), padding=1)  -- plain-JAX glue
    y = lax.reduce_window(y, jnp.array(-jnp.inf, y.dtype), lax.max,
                          window_dimensions=(1, 3, 3, 3, 1),
                          window_strides=(1, 1, 2, 2, 1),
                          padding=((0, 0), (1, 1), (1, 1), (1, 1), (0, 0)))
    for bp in p["layer1"]:
        y = bottleneck(y, bp, stride=1)
    for i, bp in enumerate(p["layer2"]):
        y = bottleneck(y, bp, stride=2 if i == 0 else 1)
    return y


# ----------------------------------------------------------------------------
# Swin transformer pieces (window attention, shifted windows, MLP)
# ----------------------------------------------------------------------------
def window_partition(x, ws):
    B, H, W, C = x.shape
    x = x.reshape(B, H // ws, ws, W // ws, ws, C)
    return x.transpose(0, 1, 3, 2, 4, 5).reshape(-1, ws * ws, C)


def window_reverse(w, ws, B, H, W):
    C = w.shape[-1]
    x = w.reshape(B, H // ws, W // ws, ws, ws, C)
    return x.transpose(0, 1, 3, 2, 4, 5).reshape(B, H, W, C)


def rel_pos_index(ws):
    coords = jnp.stack(jnp.meshgrid(jnp.arange(ws), jnp.arange(ws), indexing="ij"))
    cf = coords.reshape(2, -1)
    rel = cf[:, :, None] - cf[:, None, :]
    rel = rel.transpose(1, 2, 0) + (ws - 1)
    return rel[..., 0] * (2 * ws - 1) + rel[..., 1]      # (N, N)


def make_attn_mask(H, W, ws, shift):
    img = np.zeros((1, H, W, 1), np.float32)
    cnt = 0
    for hsl in (slice(0, -ws), slice(-ws, -shift), slice(-shift, None)):
        for wsl in (slice(0, -ws), slice(-ws, -shift), slice(-shift, None)):
            img[:, hsl, wsl, :] = cnt
            cnt += 1
    mw = window_partition(jnp.asarray(img), ws).reshape(-1, ws * ws)
    diff = mw[:, None, :] - mw[:, :, None]
    return jnp.where(diff != 0, -100.0, 0.0)             # (nW, N, N)


def window_attention(xw, p, num_heads, mask):
    # TODO(synk): fuse qk^T + bias + mask + softmax + attn@v into one Pallas
    # kernel with N=49 padded to a lane-friendly width; kept in XLA for now.
    nWB, N, C = xw.shape
    hd = C // num_heads
    qkv = matmul(xw.reshape(-1, C), p["qkv_w"].T, bias=p["qkv_b"])
    qkv = qkv.reshape(nWB, N, 3, num_heads, hd).transpose(2, 0, 3, 1, 4)
    q, k, v = qkv[0], qkv[1], qkv[2]                      # (nWB, h, N, hd)
    q = q * (hd ** -0.5)
    attn = jnp.einsum("bhnd,bhmd->bhnm", q, k)
    attn = attn + p["rel_bias"][None]                     # precomputed (h, N, N)
    if mask is not None:
        nW = mask.shape[0]
        attn = attn.reshape(nWB // nW, nW, num_heads, N, N) + mask[None, :, None]
        attn = attn.reshape(nWB, num_heads, N, N)
    attn = jax.nn.softmax(attn, axis=-1)
    out = jnp.einsum("bhnm,bhmd->bhnd", attn, v)
    out = out.transpose(0, 2, 1, 3).reshape(nWB, N, C)
    out = matmul(out.reshape(-1, C), p["proj_w"].T, bias=p["proj_b"])
    return out.reshape(nWB, N, C)


def swin_block(x, p, H, W):
    B_, L, C = x.shape
    ws, shift, heads = p["window_size"], p["shift"], p["num_heads"]
    shortcut = x
    y = layernorm(x.reshape(-1, C), p["norm1_g"], p["norm1_b"]).reshape(B_, H, W, C)
    if shift > 0:
        y = jnp.roll(y, (-shift, -shift), axis=(1, 2))
    xw = window_partition(y, ws)
    aw = window_attention(xw, p["attn"], heads, p["attn_mask"])
    y = window_reverse(aw, ws, B_, H, W)
    if shift > 0:
        y = jnp.roll(y, (shift, shift), axis=(1, 2))
    x = shortcut + y.reshape(B_, L, C)
    h = layernorm(x.reshape(-1, C), p["norm2_g"], p["norm2_b"])
    h = matmul(h, p["fc1_w"].T, bias=p["fc1_b"], act="gelu")   # GELU fused in epilogue
    h = matmul(h, p["fc2_w"].T, bias=p["fc2_b"])
    x = x + h.reshape(B_, L, C)
    return x


def swin_forward(frames, p):
    # frames: (B*T, H, W, 512)
    BT, H, W, C = frames.shape
    E = p["pe_w"].shape[0]
    # proj (512->E) and patch_embed (E->E) are back-to-back 1x1 convs with no
    # nonlinearity between them -> fold into a single matmul.
    w_comb = (p["pe_w"] @ p["proj_w"]).T              # (512, E)
    b_comb = p["pe_w"] @ p["proj_b"] + p["pe_b"]      # (E,)
    y = matmul(frames.reshape(-1, C), w_comb, bias=b_comb)
    y = layernorm(y, p["pe_norm_g"], p["pe_norm_b"])  # patch_norm
    tokens = y.reshape(BT, H * W, E)                  # pos_drop = identity (eval)
    for blk in p["swin_blocks"]:
        tokens = swin_block(tokens, blk, H, W)
    y = layernorm(tokens.reshape(-1, E), p["swin_norm_g"], p["swin_norm_b"])
    return y.reshape(BT, H * W, E).mean(axis=1)       # mean over tokens


# ----------------------------------------------------------------------------
# Temporal nn.TransformerEncoder (post-norm, ReLU FFN, eval-mode dropout)
# These GEMMs have M = B*T (tiny) -> routed to plain XLA inside matmul().
# ----------------------------------------------------------------------------
def mha(x, p, num_heads):
    B, S, C = x.shape
    hd = C // num_heads
    qkv = matmul(x.reshape(-1, C), p["in_w"].T, bias=p["in_b"])
    qkv = qkv.reshape(B, S, 3, num_heads, hd).transpose(2, 0, 3, 1, 4)
    q, k, v = qkv[0], qkv[1], qkv[2]
    attn = jnp.einsum("bhsd,bhtd->bhst", q, k) * (hd ** -0.5)
    attn = jax.nn.softmax(attn, axis=-1)
    out = jnp.einsum("bhst,bhtd->bhsd", attn, v).transpose(0, 2, 1, 3).reshape(B, S, C)
    out = matmul(out.reshape(-1, C), p["out_w"].T, bias=p["out_b"])
    return out.reshape(B, S, C)


def transformer_encoder_layer(x, p, num_heads=8):
    B, S, C = x.shape
    a = mha(x, p, num_heads)
    x = layernorm((x + a).reshape(-1, C), p["ln1_g"], p["ln1_b"]).reshape(B, S, C)
    h = matmul(x.reshape(-1, C), p["lin1_w"].T, bias=p["lin1_b"], act="relu")
    h = matmul(h, p["lin2_w"].T, bias=p["lin2_b"]).reshape(B, S, C)
    x = layernorm((x + h).reshape(-1, C), p["ln2_g"], p["ln2_b"]).reshape(B, S, C)
    return x


# ----------------------------------------------------------------------------
# Full forward
# ----------------------------------------------------------------------------
def resnet_swin_forward(x, params):
    # x: (B, 3, T, H, W) -- PyTorch NCDHW input layout
    x = jnp.transpose(x, (0, 2, 3, 4, 1)).astype(jnp.float32)   # -> (B, T, H, W, 3)
    feat = resnet_forward(x, params["resnet"])                  # (B, T', H', W', 512) bf16
    B, T, H, W, C = feat.shape
    frames = feat.reshape(B * T, H, W, C)   # == x.permute(0,2,1,3,4).reshape(B*T, C, H, W)
    pooled = swin_forward(frames, params)   # (B*T, embed)
    E = pooled.shape[-1]
    y = pooled.reshape(B, T, E)
    for lp in params["temporal"]:
        y = transformer_encoder_layer(y, lp, num_heads=8)
    y = y.mean(axis=1)                                          # (B, embed)
    out = matmul(y, params["fc_w"].T, bias=params["fc_b"])      # (B, 1) via XLA path
    return out


# ----------------------------------------------------------------------------
# Deterministic parameter initialisation (shapes follow the PyTorch module)
# ----------------------------------------------------------------------------
def _normal(key, shape, std):
    return std * jax.random.normal(key, shape, jnp.float32)


def _bn(c):
    return {"gamma": jnp.ones((c,), jnp.float32), "beta": jnp.zeros((c,), jnp.float32),
            "mean": jnp.zeros((c,), jnp.float32), "var": jnp.ones((c,), jnp.float32)}


def _conv3d_w(key, cout, cin, k):
    fan_in = cin * k[0] * k[1] * k[2]
    return _normal(key, (cout, cin) + tuple(k), 1.0 / math.sqrt(fan_in))


def _linear(key, cout, cin):
    return _normal(key, (cout, cin), 1.0 / math.sqrt(cin)), jnp.zeros((cout,), jnp.float32)


def _bottleneck_params(key, cin, cmid, stride):
    cout = cmid * 4
    ks = jax.random.split(key, 4)
    p = {"w1": _conv3d_w(ks[0], cmid, cin, (1, 1, 1)), "bn1": _bn(cmid),
         "w2": _conv3d_w(ks[1], cmid, cmid, (3, 3, 3)), "bn2": _bn(cmid),
         "w3": _conv3d_w(ks[2], cout, cmid, (1, 1, 1)), "bn3": _bn(cout)}
    if stride != 1 or cin != cout:
        p["down_w"] = _conv3d_w(ks[3], cout, cin, (1, 1, 1))
        p["down_bn"] = _bn(cout)
    return p


def _swin_block_params(key, dim, num_heads, window_size, shift, H, W):
    ks = jax.random.split(key, 5)
    qkv_w, qkv_b = _linear(ks[0], 3 * dim, dim)
    proj_w, proj_b = _linear(ks[1], dim, dim)
    fc1_w, fc1_b = _linear(ks[2], 4 * dim, dim)
    fc2_w, fc2_b = _linear(ks[3], dim, 4 * dim)
    table = _normal(ks[4], ((2 * window_size - 1) ** 2, num_heads), 0.02)
    # Precompute the relative-position bias once (review item: no per-forward gather).
    N = window_size * window_size
    idx = rel_pos_index(window_size).reshape(-1)
    rel_bias = table[idx].reshape(N, N, num_heads).transpose(2, 0, 1)   # (h, N, N)
    p = {"norm1_g": jnp.ones((dim,)), "norm1_b": jnp.zeros((dim,)),
         "norm2_g": jnp.ones((dim,)), "norm2_b": jnp.zeros((dim,)),
         "attn": {"qkv_w": qkv_w, "qkv_b": qkv_b, "proj_w": proj_w, "proj_b": proj_b,
                  "rel_bias": rel_bias, "window_size": window_size},
         "fc1_w": fc1_w, "fc1_b": fc1_b, "fc2_w": fc2_w, "fc2_b": fc2_b,
         "window_size": window_size, "shift": shift, "num_heads": num_heads,
         "attn_mask": make_attn_mask(H, W, window_size, shift) if shift > 0 else None}
    return p


def _temporal_layer_params(key, dim, ff):
    ks = jax.random.split(key, 4)
    in_w, in_b = _linear(ks[0], 3 * dim, dim)
    out_w, out_b = _linear(ks[1], dim, dim)
    l1_w, l1_b = _linear(ks[2], ff, dim)
    l2_w, l2_b = _linear(ks[3], dim, ff)
    return {"in_w": in_w, "in_b": in_b, "out_w": out_w, "out_b": out_b,
            "lin1_w": l1_w, "lin1_b": l1_b, "lin2_w": l2_w, "lin2_b": l2_b,
            "ln1_g": jnp.ones((dim,)), "ln1_b": jnp.zeros((dim,)),
            "ln2_g": jnp.ones((dim,)), "ln2_b": jnp.zeros((dim,))}


def init_params(key, res_h, res_w, embed_dim=96, num_heads=3, window_size=7,
                depth=2, num_classes=1):
    keys = jax.random.split(key, 8)
    # ResNet
    rk = jax.random.split(keys[0], 16)
    resnet = {"conv1_w": _conv3d_w(rk[0], 64, 3, (3, 7, 7)), "bn1": _bn(64)}
    layer1, layer2 = [], []
    for i, (cin, cmid, s) in enumerate([(64, 64, 1), (256, 64, 1), (256, 64, 1)]):
        layer1.append(_bottleneck_params(rk[1 + i], cin, cmid, s))
    for i, (cin, cmid, s) in enumerate([(256, 128, 2), (512, 128, 1),
                                        (512, 128, 1), (512, 128, 1)]):
        layer2.append(_bottleneck_params(rk[4 + i], cin, cmid, s))
    resnet["layer1"], resnet["layer2"] = layer1, layer2

    p = {"resnet": resnet}
    p["proj_w"], p["proj_b"] = _linear(keys[1], embed_dim, 512)          # Conv2d(512,96,1)
    p["pe_w"], p["pe_b"] = _linear(keys[2], embed_dim, embed_dim)        # patch_embed Conv2d(96,96,1)
    p["pe_norm_g"] = jnp.ones((embed_dim,))
    p["pe_norm_b"] = jnp.zeros((embed_dim,))

    sk = jax.random.split(keys[3], depth)
    blocks = []
    for i in range(depth):
        ws_eff = window_size
        shift = 0 if i % 2 == 0 else window_size // 2
        if min(res_h, res_w) <= window_size:        # Swin's resolution<=window rule
            ws_eff = min(res_h, res_w)
            shift = 0
        assert res_h % ws_eff == 0 and res_w % ws_eff == 0
        blocks.append(_swin_block_params(sk[i], embed_dim, num_heads, ws_eff,
                                         shift, res_h, res_w))
    p["swin_blocks"] = blocks
    p["swin_norm_g"] = jnp.ones((embed_dim,))
    p["swin_norm_b"] = jnp.zeros((embed_dim,))

    tk_ = jax.random.split(keys[4], 2)
    p["temporal"] = [_temporal_layer_params(tk_[i], embed_dim, 2048) for i in range(2)]
    p["fc_w"], p["fc_b"] = _linear(keys[5], num_classes, embed_dim)
    return p


# ----------------------------------------------------------------------------
if __name__ == "__main__":
    key = jax.random.PRNGKey(0)
    kx, kp = jax.random.split(key)

    # Small video input: (B, 3, T, H, W).  H=W=112 -> 14x14 Swin resolution
    # (divisible by window 7, >7 so shifted windows are exercised); T=4 -> 2
    # temporal frames after layer2's stride-2 3D conv.
    B, T, H, W = 2, 4, 112, 112
    x = jax.random.normal(kx, (B, 3, T, H, W), jnp.float32)

    params = init_params(kp, res_h=H // 8, res_w=W // 8)

    out = resnet_swin_forward(x, params)
    out = jax.block_until_ready(out)

    assert out.shape == (B, 1), out.shape
    assert bool(jnp.all(jnp.isfinite(out)))
    print("KERNEL_OK")
</pallas_src>

<mosaic_0001>
module attributes {stable_mosaic.version = 11 : i64} {
  func.func @kernel(%arg0: i32, %arg1: i32, %arg2: memref<512x448xbf16, #tpu.memory_space<vmem>>, %arg3: memref<448x128xbf16, #tpu.memory_space<vmem>>, %arg4: memref<1x128xf32, #tpu.memory_space<vmem>>, %arg5: memref<1x128xf32, #tpu.memory_space<vmem>>, %arg6: memref<512x128xbf16, #tpu.memory_space<vmem>>) attributes {dimension_semantics = [#tpu.dimension_semantics<parallel>, #tpu.dimension_semantics<parallel>], iteration_bounds = array<i64: 49, 1>, scalar_prefetch = 0 : i64, scratch_operands = 0 : i64, tpu.core_type = #tpu.core_type<tc>, window_params = [{transform_indices = @transform_0, window_bounds = array<i64: 512, 448>}, {transform_indices = @transform_1, window_bounds = array<i64: 448, 128>}, {transform_indices = @transform_2, window_bounds = array<i64: 1, 128>}, {transform_indices = @transform_3, window_bounds = array<i64: 1, 128>}, {transform_indices = @transform_4, window_bounds = array<i64: 512, 128>}]} {
    %c0 = arith.constant 0 : index
    %c0_0 = arith.constant 0 : index
    %0 = vector.load %arg2[%c0, %c0_0] : memref<512x448xbf16, #tpu.memory_space<vmem>>, vector<512x448xbf16>
    %c0_1 = arith.constant 0 : index
    %c0_2 = arith.constant 0 : index
    %1 = vector.load %arg3[%c0_1, %c0_2] : memref<448x128xbf16, #tpu.memory_space<vmem>>, vector<448x128xbf16>
    %cst = arith.constant dense<0.000000e+00> : vector<512x128xf32>
    %2 = tpu.matmul %0, %1, %cst {dimension_numbers = #tpu.dot_dimension_numbers<[1], [0], [0], [1], [0, 0, 1, 1], [], []>} : vector<512x448xbf16>, vector<448x128xbf16>, vector<512x128xf32> -> vector<512x128xf32>
    %c0_3 = arith.constant 0 : index
    %c0_4 = arith.constant 0 : index
    %3 = vector.load %arg4[%c0_3, %c0_4] : memref<1x128xf32, #tpu.memory_space<vmem>>, vector<1x128xf32>
    %4 = vector.broadcast %3 : vector<1x128xf32> to vector<512x128xf32>
    %5 = arith.mulf %2, %4 : vector<512x128xf32>
    %c0_5 = arith.constant 0 : index
    %c0_6 = arith.constant 0 : index
    %6 = vector.load %arg5[%c0_5, %c0_6] : memref<1x128xf32, #tpu.memory_space<vmem>>, vector<1x128xf32>
    %7 = vector.broadcast %6 : vector<1x128xf32> to vector<512x128xf32>
    %8 = arith.addf %5, %7 : vector<512x128xf32>
    %cst_7 = arith.constant 0.000000e+00 : f32
    %9 = vector.broadcast %cst_7 : f32 to vector<512x128xf32>
    %10 = arith.cmpf oge, %8, %9 : vector<512x128xf32>
    %cst_8 = arith.constant 1.000000e-01 : f32
    %11 = vector.broadcast %cst_8 : f32 to vector<512x128xf32>
    %12 = arith.mulf %11, %8 : vector<512x128xf32>
    %13 = arith.select %10, %8, %12 : vector<512x128xi1>, vector<512x128xf32>
    %14 = arith.truncf %13 : vector<512x128xf32> to vector<512x128xbf16>
    %c0_9 = arith.constant 0 : index
    %c0_10 = arith.constant 0 : index
    %15 = vector.load %arg6[%c0_9, %c0_10] : memref<512x128xbf16, #tpu.memory_space<vmem>>, vector<512x128xbf16>
    tpu.vector_store %arg6[%c0_9, %c0_10], %14 {strides = array<i32>} : memref<512x128xbf16, #tpu.memory_space<vmem>>, vector<512x128xbf16>,
    return
  }
  func.func @transform_0(%arg0: i32, %arg1: i32) -> (i32, i32) {
    %c0_i32 = arith.constant 0 : i32
    %c0_i32_0 = arith.constant 0 : i32
    return %arg0, %c0_i32 : i32, i32
  }
  func.func @transform_1(%arg0: i32, %arg1: i32) -> (i32, i32) {
    %c0_i32 = arith.constant 0 : i32
    %c0_i32_0 = arith.constant 0 : i32
    return %c0_i32, %arg1 : i32, i32
  }
  func.func @transform_2(%arg0: i32, %arg1: i32) -> (i32, i32) {
    %c0_i32 = arith.constant 0 : i32
    %c0_i32_0 = arith.constant 0 : i32
    return %c0_i32, %arg1 : i32, i32
  }
  func.func @transform_3(%arg0: i32, %arg1: i32) -> (i32, i32) {
    %c0_i32 = arith.constant 0 : i32
    %c0_i32_0 = arith.constant 0 : i32
    return %c0_i32, %arg1 : i32, i32
  }
  func.func @transform_4(%arg0: i32, %arg1: i32) -> (i32, i32) {
    %c0_i32 = arith.constant 0 : i32
    return %arg0, %arg1 : i32, i32
  }
}

</mosaic_0001>

<llo_original>
// kernel: tpu_custom_call.1
$region0: #{tpu_custom_call.1}
  #allocation0 [shape = 'u32[]', space=smem, size = 0x4, offset = 0x4, fixed_abs, tag = 'smem constant byte address 0x4 - core index']
  #allocation1 [shape = 'u32[144,128]{1,0:T(1,128)}', space=vmem, size = 0x12000, scoped, tag = 'internal scratch']
  %s0 = inlined_call_operand.vmem [shape: bf16[25088,448], index: 0, kind: input, shape index: {}]
  %s1 = inlined_call_operand.vmem [shape: bf16[448,128], index: 1, kind: input, shape index: {}]
  %s2 = inlined_call_operand.vmem [shape: f32[1,128], index: 2, kind: input, shape index: {}]
  %s3 = inlined_call_operand.vmem [shape: f32[1,128], index: 3, kind: input, shape index: {}]
  %s4 = inlined_call_operand.hbm [shape: bf16[25088,128], index: 4, kind: output, shape index: {}]
  %s5 = sld [smem:[#allocation0]]
  $region49: #{tpu_custom_call.1} parent=0
    _
  %s7 = ssub.s32 1, %s5
  %s8 = scalar_select 0, %s7, %s5
  $region1: #{tpu_custom_call.1} parent=0
    #allocation2 [shape = 'u8[262144]{0}', space=vmem, size = 0x40000, scoped, tag = 'output window, operand 0']
    #allocation3 [shape = 's32[2]{0}', space=sflag, size = 0x8, scoped, tag = 'scoped memory for tpu_custom_call.1']
    %9 = vsyncpa [#allocation3], 0
    %s10 = scalar_lea.sflag [#allocation3], 1
    %11 = vsyncpa %s10, 0
    loop: start=0, step=1, limit=51
    $region2: #{tpu_custom_call.1} parent=1 // loop_pre_header
      _
    $region3: #{tpu_custom_call.1} parent=1 // loop_header
      %s13 = sphi 0, %s17
      %p14 = scmp.ge.s32.totalorder %s13, 51
      %s20 = sphi 0, %s32
      %s21 = sphi 0, %s28
      %s22 = sphi 0, %s20
      %s23 = sphi 0, %s21
      %s24 = sphi 0, %s22
      %s25 = sphi 0, %s23
      %s35 = sphi 0, %s37
      %s38 = sphi 0, %s35
      %s39 = sphi 0, %s38
      %s55 = sphi 0, %s39
      %s61 = sphi 0, %s63
      %s64 = sphi 0, %s61
      %s65 = sphi 0, %s64
      %s81 = sphi 0, %s65
      %s87 = sphi 0, %s89
      %s90 = sphi 0, %s87
      %s91 = sphi 0, %s90
      %s107 = sphi 0, %s91
      %s113 = sphi 0, %s115
      %s116 = sphi 0, %s113
      %s117 = sphi 0, %s116
      %s133 = sphi 0, %s117
      %s141 = sphi 0, %s143
      %s144 = sphi 0, %s141
      %s145 = sphi 0, %s144
      %s161 = sphi 0, %s145
    $region4: #{tpu_custom_call.1} parent=1 // loop_header_branch
      %16 = sbr.rel (%p14) target = $region8
    $region5: #{tpu_custom_call.1} parent=1 // loop_body
      %s18 = ssub.s32 %s13, 1
      %s19 = ssub.s32 %s13, 2
      %s26 = sadd.s32 1, %s21
      %p27 = scmp.ge.s32.totalorder %s26, 1
      %s28 = scalar_select %p27, 0, %s26
      %s29 = sadd.s32 1, %s20
      %s30 = scalar_select %p27, %s29, %s20
      %p31 = scmp.ge.s32.totalorder %s30, 49
      %s32 = scalar_select %p31, 0, %s30
      %s33 = ssub.s32 %s20, %s32
      %p34 = scmp.eq.s32.totalorder %s33, 0
      %s36 = sadd.s32 %s35, 1
      %s37 = scalar_select %p34, %s35, %s36
      %p40 = pneg %p34
      %p41 = scmp.eq.s32.totalorder %s13, 48
      %p42 = por %p40, %p41
      %p43 = scmp.ne.s32.totalorder %s35, %s38
      %p44 = scmp.eq.s32.totalorder %s13, 0
      %p45 = por %p43, %p44
      %p46 = scmp.ne.s32.totalorder %s35, %s38
      %p47 = scmp.eq.s32.totalorder %s18, 48
      %p48 = por %p46, %p47
      %p49 = scmp.ne.s32.totalorder %s38, %s39
      %p50 = scmp.eq.s32.totalorder %s18, 0
      %p51 = por %p49, %p50
      %p52 = scmp.ne.s32.totalorder %s38, %s39
      %p53 = scmp.eq.s32.totalorder %s19, 48
      %p54 = por %p52, %p53
      %p56 = scmp.ne.s32.totalorder %s39, %s55
      %p57 = scmp.eq.s32.totalorder %s19, 0
      %p58 = por %p56, %p57
      %s59 = ssub.s32 %s21, %s28
      %p60 = scmp.eq.s32.totalorder %s59, 0
      %s62 = sadd.s32 %s61, 1
      %s63 = scalar_select %p60, %s61, %s62
      %p66 = pneg %p60
      %p67 = scmp.eq.s32.totalorder %s13, 48
      %p68 = por %p66, %p67
      %p69 = scmp.ne.s32.totalorder %s61, %s64
      %p70 = scmp.eq.s32.totalorder %s13, 0
      %p71 = por %p69, %p70
      %p72 = scmp.ne.s32.totalorder %s61, %s64
      %p73 = scmp.eq.s32.totalorder %s18, 48
      %p74 = por %p72, %p73
      %p75 = scmp.ne.s32.totalorder %s64, %s65
      %p76 = scmp.eq.s32.totalorder %s18, 0
      %p77 = por %p75, %p76
      %p78 = scmp.ne.s32.totalorder %s64, %s65
      %p79 = scmp.eq.s32.totalorder %s19, 48
      %p80 = por %p78, %p79
      %p82 = scmp.ne.s32.totalorder %s65, %s81
      %p83 = scmp.eq.s32.totalorder %s19, 0
      %p84 = por %p82, %p83
      %s85 = ssub.s32 %s21, %s28
      %p86 = scmp.eq.s32.totalorder %s85, 0
      %s88 = sadd.s32 %s87, 1
      %s89 = scalar_select %p86, %s87, %s88
      %p92 = pneg %p86
      %p93 = scmp.eq.s32.totalorder %s13, 48
      %p94 = por %p92, %p93
      %p95 = scmp.ne.s32.totalorder %s87, %s90
      %p96 = scmp.eq.s32.totalorder %s13, 0
      %p97 = por %p95, %p96
      %p98 = scmp.ne.s32.totalorder %s87, %s90
      %p99 = scmp.eq.s32.totalorder %s18, 48
      %p100 = por %p98, %p99
      %p101 = scmp.ne.s32.totalorder %s90, %s91
      %p102 = scmp.eq.s32.totalorder %s18, 0
      %p103 = por %p101, %p102
      %p104 = scmp.ne.s32.totalorder %s90, %s91
      %p105 = scmp.eq.s32.totalorder %s19, 48
      %p106 = por %p104, %p105
      %p108 = scmp.ne.s32.totalorder %s91, %s107
      %p109 = scmp.eq.s32.totalorder %s19, 0
      %p110 = por %p108, %p109
      %s111 = ssub.s32 %s21, %s28
      %p112 = scmp.eq.s32.totalorder %s111, 0
      %s114 = sadd.s32 %s113, 1
      %s115 = scalar_select %p112, %s113, %s114
      %p118 = pneg %p112
      %p119 = scmp.eq.s32.totalorder %s13, 48
      %p120 = por %p118, %p119
      %p121 = scmp.ne.s32.totalorder %s113, %s116
      %p122 = scmp.eq.s32.totalorder %s13, 0
      %p123 = por %p121, %p122
      %p124 = scmp.ne.s32.totalorder %s113, %s116
      %p125 = scmp.eq.s32.totalorder %s18, 48
      %p126 = por %p124, %p125
      %p127 = scmp.ne.s32.totalorder %s116, %s117
      %p128 = scmp.eq.s32.totalorder %s18, 0
      %p129 = por %p127, %p128
      %p130 = scmp.ne.s32.totalorder %s116, %s117
      %p131 = scmp.eq.s32.totalorder %s19, 48
      %p132 = por %p130, %p131
      %p134 = scmp.ne.s32.totalorder %s117, %s133
      %p135 = scmp.eq.s32.totalorder %s19, 0
      %p136 = por %p134, %p135
      %s137 = ssub.s32 %s20, %s32
      %s138 = ssub.s32 %s21, %s28
      %s139 = sor.u32 %s137, %s138
      %p140 = scmp.eq.s32.totalorder %s139, 0
      %s142 = sadd.s32 %s141, 1
      %s143 = scalar_select %p140, %s141, %s142
      %p146 = pneg %p140
      %p147 = scmp.eq.s32.totalorder %s13, 48
      %p148 = por %p146, %p147
      %p149 = scmp.ne.s32.totalorder %s141, %s144
      %p150 = scmp.eq.s32.totalorder %s13, 0
      %p151 = por %p149, %p150
      %p152 = scmp.ne.s32.totalorder %s141, %s144
      %p153 = scmp.eq.s32.totalorder %s18, 48
      %p154 = por %p152, %p153
      %p155 = scmp.ne.s32.totalorder %s144, %s145
      %p156 = scmp.eq.s32.totalorder %s18, 0
      %p157 = por %p155, %p156
      %p158 = scmp.ne.s32.totalorder %s144, %s145
      %p159 = scmp.eq.s32.totalorder %s19, 48
      %p160 = por %p158, %p159
      %p162 = scmp.ne.s32.totalorder %s145, %s161
      %p163 = scmp.eq.s32.totalorder %s19, 0
      %p164 = por %p162, %p163
      %p165 = scmp.le.s32.totalorder 1, %s13
      %p166 = scmp.lt.s32.totalorder %s13, 50
      %p167 = pnand %p165, %p166
      %p168 = pneg %p167
      // Predicated region
      $region9: #{tpu_custom_call.1} parent=5 // pred_check
        _
      $region10: #{tpu_custom_call.1} parent=5 // pred_check_branch
        %170 = sbr.rel (%p167) target = $region12
      $region11: #{tpu_custom_call.1} parent=5 // pred_region
        %s171 = ssub.s32 %s13, 1
        // Predicated region
        $region13: #{tpu_custom_call.1} parent=11 // pred_check
          %p172 = pneg %p77
        $region14: #{tpu_custom_call.1} parent=11 // pred_check_branch
          %174 = sbr.rel (%p172) target = $region16
        $region15: #{tpu_custom_call.1} parent=11 // pred_region
          %p175 = scmp.lt.s32.totalorder %s23, 0
          %s176 = scalar_select %p175, %s23, 0
          %s177 = smul.addr %s176, 4
          %s178 = scalar_lea.vmem %s1, %s177
        $region16: #{tpu_custom_call.1} parent=11 // pred_fallthru
          _
        // Predicated region
        $region17: #{tpu_custom_call.1} parent=11 // pred_check
          %p179 = pneg %p103
        $region18: #{tpu_custom_call.1} parent=11 // pred_check_branch
          %181 = sbr.rel (%p179) target = $region20
        $region19: #{tpu_custom_call.1} parent=11 // pred_region
          %p182 = scmp.lt.s32.totalorder %s23, 0
          %s183 = scalar_select %p182, %s23, 0
          %s184 = scalar_lea.vmem %s2, %s183
        $region20: #{tpu_custom_call.1} parent=11 // pred_fallthru
          _
        // Predicated region
        $region21: #{tpu_custom_call.1} parent=11 // pred_check
          %p185 = pneg %p129
        $region22: #{tpu_custom_call.1} parent=11 // pred_check_branch
          %187 = sbr.rel (%p185) target = $region24
        $region23: #{tpu_custom_call.1} parent=11 // pred_region
          %p188 = scmp.lt.s32.totalorder %s23, 0
          %s189 = scalar_select %p188, %s23, 0
          %s190 = scalar_lea.vmem %s3, %s189
        $region24: #{tpu_custom_call.1} parent=11 // pred_fallthru
          _
      $region12: #{tpu_custom_call.1} parent=5 // pred_fallthru
        _
      %p191 = scmp.lt.s32.totalorder %s13, 49
      // Predicated region
      $region25: #{tpu_custom_call.1} parent=5 // pred_check
        %p192 = pneg %p191
      $region26: #{tpu_custom_call.1} parent=5 // pred_check_branch
        %194 = sbr.rel (%p192) target = $region28
      $region27: #{tpu_custom_call.1} parent=5 // pred_region
        // Predicated region
        $region29: #{tpu_custom_call.1} parent=27 // pred_check
          %p195 = pneg %p45
        $region30: #{tpu_custom_call.1} parent=27 // pred_check_branch
          %197 = sbr.rel (%p195) target = $region32
        $region31: #{tpu_custom_call.1} parent=27 // pred_region
          %s198 = smul.u32 64, %s20
          %p199 = scmp.lt.s32.totalorder %s198, 3135
          %s200 = scalar_select %p199, %s198, 3135
          %s201 = smul.addr %s200, 4
          %s202 = smul.addr %s201, 4
          %s203 = scalar_lea.vmem %s0, %s202
          %s204 = smul.u32 64, %s20
        $region32: #{tpu_custom_call.1} parent=27 // pred_fallthru
          _
      $region28: #{tpu_custom_call.1} parent=5 // pred_fallthru
        _
      %p205 = scmp.le.s32.totalorder 1, %s13
      %p206 = scmp.lt.s32.totalorder %s13, 50
      %p207 = pnand %p205, %p206
      %p208 = pneg %p207
      // Predicated region
      $region33: #{tpu_custom_call.1} parent=5 // pred_check
        _
      $region34: #{tpu_custom_call.1} parent=5 // pred_check_branch
        %210 = sbr.rel (%p207) target = $region36
      $region35: #{tpu_custom_call.1} parent=5 // pred_region
        %s211 = ssub.s32 %s13, 1
        %s212 = smul.u32 64, %s22
        %p213 = scmp.lt.s32.totalorder %s212, 3135
        %s214 = scalar_select %p213, %s212, 3135
        %s215 = smul.addr %s214, 4
        %s216 = smul.addr %s215, 4
        %s217 = scalar_lea.vmem %s0, %s216
        %p218 = pneg %p51
        %p219 = pneg %p48
        %p220 = scmp.lt.s32.totalorder %s23, 0
        %s221 = scalar_select %p220, %s23, 0
        %s222 = smul.addr %s221, 4
        %s223 = scalar_lea.vmem %s1, %s222
        %p224 = pneg %p77
        %p225 = pneg %p74
        %p226 = scmp.lt.s32.totalorder %s23, 0
        %s227 = scalar_select %p226, %s23, 0
        %s228 = scalar_lea.vmem %s2, %s227
        %p229 = pneg %p103
        %p230 = pneg %p100
        %p231 = scmp.lt.s32.totalorder %s23, 0
        %s232 = scalar_select %p231, %s23, 0
        %s233 = scalar_lea.vmem %s3, %s232
        %p234 = pneg %p129
        %p235 = pneg %p126
        %p236 = pneg %p157
        %p237 = pneg %p154
        %s238 = sand.u32 %s144, 1
        %s239 = scalar_lea.sflag [#allocation3], %s238
        %s240 = sand.u32 %s144, 1
        %s241 = smul.addr %s240, 256
        %s242 = scalar_lea.vmem [#allocation2], %s241
        %s243 = smul.u32 64, %s22
        %p244 = scmp.lt.s32.totalorder %s243, 3135
        %s245 = scalar_select %p244, %s243, 3135
        %s246 = smul.addr %s245, 4
        %s247 = smul.addr %s246, 4
        %s248 = scalar_lea.vmem %s0, %s247
        %s249 = smul.u32 64, %s22
        %p250 = scmp.lt.s32.totalorder %s23, 0
        %s251 = scalar_select %p250, %s23, 0
        %s252 = smul.addr %s251, 4
        %s253 = scalar_lea.vmem %s1, %s252
        %p254 = scmp.lt.s32.totalorder %s23, 0
        %s255 = scalar_select %p254, %s23, 0
        %s256 = scalar_lea.vmem %s2, %s255
        %p257 = scmp.lt.s32.totalorder %s23, 0
        %s258 = scalar_select %p257, %s23, 0
        %s259 = scalar_lea.vmem %s3, %s258
        %s260 = smul.u32 64, %s22
        %v262 = vld [vmem:[%s248] sm:$0xff]
        %v263 = vld [vmem:[%s248 + $0x8] sm:$0xff]
        %v264 = vld [vmem:[%s248 + $0x10] sm:$0xff]
        %v265 = vld [vmem:[%s248 + $0x18] sm:$0xff]
        %v266 = vld [vmem:[%s248 + $0x20] sm:$0xff]
        %v267 = vld [vmem:[%s248 + $0x28] sm:$0xff]
        %v268 = vld [vmem:[%s248 + $0x30] sm:$0xff]
        %v269 = vld [vmem:[%s248 + $0x38] sm:$0xff]
        %v270 = vld [vmem:[%s248 + $0x40] sm:$0xff]
        %v271 = vld [vmem:[%s248 + $0x48] sm:$0xff]
        %v272 = vld [vmem:[%s248 + $0x50] sm:$0xff]
        %v273 = vld [vmem:[%s248 + $0x58] sm:$0xff]
        %v274 = vld [vmem:[%s248 + $0x60] sm:$0xff]
        %v275 = vld [vmem:[%s248 + $0x68] sm:$0xff]
        %v276 = vld [vmem:[%s248 + $0x70] sm:$0xff]
        %v277 = vld [vmem:[%s248 + $0x78] sm:$0xff]
        %v278 = vld [vmem:[%s248 + $0x80] sm:$0xff]
        %v279 = vld [vmem:[%s248 + $0x88] sm:$0xff]
        %v280 = vld [vmem:[%s248 + $0x90] sm:$0xff]
        %v281 = vld [vmem:[%s248 + $0x98] sm:$0xff]
        %v282 = vld [vmem:[%s248 + $0xa0] sm:$0xff]
        %v283 = vld [vmem:[%s248 + $0xa8] sm:$0xff]
        %v284 = vld [vmem:[%s248 + $0xb0] sm:$0xff]
        %v285 = vld [vmem:[%s248 + $0xb8] sm:$0xff]
        %v286 = vld [vmem:[%s248 + $0xc0] sm:$0xff]
        %v287 = vld [vmem:[%s248 + $0xc8] sm:$0xff]
        %v288 = vld [vmem:[%s248 + $0xd0] sm:$0xff]
        %v289 = vld [vmem:[%s248 + $0xd8] sm:$0xff]
        %v290 = vld [vmem:[%s248 + $0xe0] sm:$0xff]
        %v291 = vld [vmem:[%s248 + $0xe8] sm:$0xff]
        %v292 = vld [vmem:[%s248 + $0xf0] sm:$0xff]
        %v293 = vld [vmem:[%s248 + $0xf8] sm:$0xff]
        %v294 = vld [vmem:[%s248 + $0x100] sm:$0xff]
        %v295 = vld [vmem:[%s248 + $0x108] sm:$0xff]
        %v296 = vld [vmem:[%s248 + $0x110] sm:$0xff]
        %v297 = vld [vmem:[%s248 + $0x118] sm:$0xff]
        %v298 = vld [vmem:[%s248 + $0x120] sm:$0xff]
        %v299 = vld [vmem:[%s248 + $0x128] sm:$0xff]
        %v300 = vld [vmem:[%s248 + $0x130] sm:$0xff]
        %v301 = vld [vmem:[%s248 + $0x138] sm:$0xff]
        %v302 = vld [vmem:[%s248 + $0x140] sm:$0xff]
        %v303 = vld [vmem:[%s248 + $0x148] sm:$0xff]
        %v304 = vld [vmem:[%s248 + $0x150] sm:$0xff]
        %v305 = vld [vmem:[%s248 + $0x158] sm:$0xff]
        %v306 = vld [vmem:[%s248 + $0x160] sm:$0xff]
        %v307 = vld [vmem:[%s248 + $0x168] sm:$0xff]
        %v308 = vld [vmem:[%s248 + $0x170] sm:$0xff]
        %v309 = vld [vmem:[%s248 + $0x178] sm:$0xff]
        %v310 = vld [vmem:[%s248 + $0x180] sm:$0xff]
        %v311 = vld [vmem:[%s248 + $0x188] sm:$0xff]
        %v312 = vld [vmem:[%s248 + $0x190] sm:$0xff]
        %v313 = vld [vmem:[%s248 + $0x198] sm:$0xff]
        %v314 = vld [vmem:[%s248 + $0x1a0] sm:$0xff]
        %v315 = vld [vmem:[%s248 + $0x1a8] sm:$0xff]
        %v316 = vld [vmem:[%s248 + $0x1b0] sm:$0xff]
        %v317 = vld [vmem:[%s248 + $0x1b8] sm:$0xff]
        %v318 = vld [vmem:[%s248 + $0x1c0] sm:$0xff]
        %v319 = vld [vmem:[%s248 + $0x1c8] sm:$0xff]
        %v320 = vld [vmem:[%s248 + $0x1d0] sm:$0xff]
        %v321 = vld [vmem:[%s248 + $0x1d8] sm:$0xff]
        %v322 = vld [vmem:[%s248 + $0x1e0] sm:$0xff]
        %v323 = vld [vmem:[%s248 + $0x1e8] sm:$0xff]
        %v324 = vld [vmem:[%s248 + $0x1f0] sm:$0xff]
        %v325 = vld [vmem:[%s248 + $0x1f8] sm:$0xff]
        %v326 = vld [vmem:[%s248 + $0x200] sm:$0xff]
        %v327 = vld [vmem:[%s248 + $0x208] sm:$0xff]
        %v328 = vld [vmem:[%s248 + $0x210] sm:$0xff]
        %v329 = vld [vmem:[%s248 + $0x218] sm:$0xff]
        %v330 = vld [vmem:[%s248 + $0x220] sm:$0xff]
        %v331 = vld [vmem:[%s248 + $0x228] sm:$0xff]
        %v332 = vld [vmem:[%s248 + $0x230] sm:$0xff]
        %v333 = vld [vmem:[%s248 + $0x238] sm:$0xff]
        %v334 = vld [vmem:[%s248 + $0x240] sm:$0xff]
        %v335 = vld [vmem:[%s248 + $0x248] sm:$0xff]
        %v336 = vld [vmem:[%s248 + $0x250] sm:$0xff]
        %v337 = vld [vmem:[%s248 + $0x258] sm:$0xff]
        %v338 = vld [vmem:[%s248 + $0x260] sm:$0xff]
        %v339 = vld [vmem:[%s248 + $0x268] sm:$0xff]
        %v340 = vld [vmem:[%s248 + $0x270] sm:$0xff]
        %v341 = vld [vmem:[%s248 + $0x278] sm:$0xff]
        %v342 = vld [vmem:[%s248 + $0x280] sm:$0xff]
        %v343 = vld [vmem:[%s248 + $0x288] sm:$0xff]
        %v344 = vld [vmem:[%s248 + $0x290] sm:$0xff]
        %v345 = vld [vmem:[%s248 + $0x298] sm:$0xff]
        %v346 = vld [vmem:[%s248 + $0x2a0] sm:$0xff]
        %v347 = vld [vmem:[%s248 + $0x2a8] sm:$0xff]
        %v348 = vld [vmem:[%s248 + $0x2b0] sm:$0xff]
        %v349 = vld [vmem:[%s248 + $0x2b8] sm:$0xff]
        %v350 = vld [vmem:[%s248 + $0x2c0] sm:$0xff]
        %v351 = vld [vmem:[%s248 + $0x2c8] sm:$0xff]
        %v352 = vld [vmem:[%s248 + $0x2d0] sm:$0xff]
        %v353 = vld [vmem:[%s248 + $0x2d8] sm:$0xff]
        %v354 = vld [vmem:[%s248 + $0x2e0] sm:$0xff]
        %v355 = vld [vmem:[%s248 + $0x2e8] sm:$0xff]
        %v356 = vld [vmem:[%s248 + $0x2f0] sm:$0xff]
        %v357 = vld [vmem:[%s248 + $0x2f8] sm:$0xff]
        %v358 = vld [vmem:[%s248 + $0x300] sm:$0xff]
        %v359 = vld [vmem:[%s248 + $0x308] sm:$0xff]
        %v360 = vld [vmem:[%s248 + $0x310] sm:$0xff]
        %v361 = vld [vmem:[%s248 + $0x318] sm:$0xff]
        %v362 = vld [vmem:[%s248 + $0x320] sm:$0xff]
        %v363 = vld [vmem:[%s248 + $0x328] sm:$0xff]
        %v364 = vld [vmem:[%s248 + $0x330] sm:$0xff]
        %v365 = vld [vmem:[%s248 + $0x338] sm:$0xff]
        %v366 = vld [vmem:[%s248 + $0x340] sm:$0xff]
        %v367 = vld [vmem:[%s248 + $0x348] sm:$0xff]
        %v368 = vld [vmem:[%s248 + $0x350] sm:$0xff]
        %v369 = vld [vmem:[%s248 + $0x358] sm:$0xff]
        %v370 = vld [vmem:[%s248 + $0x360] sm:$0xff]
        %v371 = vld [vmem:[%s248 + $0x368] sm:$0xff]
        %v372 = vld [vmem:[%s248 + $0x370] sm:$0xff]
        %v373 = vld [vmem:[%s248 + $0x378] sm:$0xff]
        %v374 = vld [vmem:[%s248 + $0x380] sm:$0xff]
        %v375 = vld [vmem:[%s248 + $0x388] sm:$0xff]
        %v376 = vld [vmem:[%s248 + $0x390] sm:$0xff]
        %v377 = vld [vmem:[%s248 + $0x398] sm:$0xff]
        %v378 = vld [vmem:[%s248 + $0x3a0] sm:$0xff]
        %v379 = vld [vmem:[%s248 + $0x3a8] sm:$0xff]
        %v380 = vld [vmem:[%s248 + $0x3b0] sm:$0xff]
        %v381 = vld [vmem:[%s248 + $0x3b8] sm:$0xff]
        %v382 = vld [vmem:[%s248 + $0x3c0] sm:$0xff]
        %v383 = vld [vmem:[%s248 + $0x3c8] sm:$0xff]
        %v384 = vld [vmem:[%s248 + $0x3d0] sm:$0xff]
        %v385 = vld [vmem:[%s248 + $0x3d8] sm:$0xff]
        %v386 = vld [vmem:[%s248 + $0x3e0] sm:$0xff]
        %v387 = vld [vmem:[%s248 + $0x3e8] sm:$0xff]
        %v388 = vld [vmem:[%s248 + $0x3f0] sm:$0xff]
        %v389 = vld [vmem:[%s248 + $0x3f8] sm:$0xff]
        %v390 = vld [vmem:[%s253] sm:$0xf]
        %v391 = vld [vmem:[%s253 + $0x4] sm:$0xf]
        %v392 = vld [vmem:[%s253 + $0x8] sm:$0xf]
        %v393 = vld [vmem:[%s253 + $0xc] sm:$0xf]
        %v394 = vld [vmem:[%s253 + $0x10] sm:$0xf]
        %v395 = vld [vmem:[%s253 + $0x14] sm:$0xf]
        %v396 = vld [vmem:[%s253 + $0x18] sm:$0xf]
        %v397 = vld [vmem:[%s253 + $0x1c] sm:$0xf]
        %v398 = vld [vmem:[%s253 + $0x20] sm:$0xf]
        %v399 = vld [vmem:[%s253 + $0x24] sm:$0xf]
        %v400 = vld [vmem:[%s253 + $0x28] sm:$0xf]
        %v401 = vld [vmem:[%s253 + $0x2c] sm:$0xf]
        %v402 = vld [vmem:[%s253 + $0x30] sm:$0xf]
        %v403 = vld [vmem:[%s253 + $0x34] sm:$0xf]
        %v404 = vld [vmem:[%s253 + $0x38] sm:$0xf]
        %v405 = vld [vmem:[%s253 + $0x3c] sm:$0xf]
        %v406 = vld [vmem:[%s253 + $0x40] sm:$0xf]
        %v407 = vld [vmem:[%s253 + $0x44] sm:$0xf]
        %v408 = vld [vmem:[%s253 + $0x48] sm:$0xf]
        %v409 = vld [vmem:[%s253 + $0x4c] sm:$0xf]
        %v410 = vld [vmem:[%s253 + $0x50] sm:$0xf]
        %v411 = vld [vmem:[%s253 + $0x54] sm:$0xf]
        %v412 = vld [vmem:[%s253 + $0x58] sm:$0xf]
        %v413 = vld [vmem:[%s253 + $0x5c] sm:$0xf]
        %v414 = vld [vmem:[%s253 + $0x60] sm:$0xf]
        %v415 = vld [vmem:[%s253 + $0x64] sm:$0xf]
        %v416 = vld [vmem:[%s253 + $0x68] sm:$0xf]
        %v417 = vld [vmem:[%s253 + $0x6c] sm:$0xf]
        %v418 = vld [vmem:[%s253 + $0x70] sm:$0xf]
        %v419 = vld [vmem:[%s253 + $0x74] sm:$0xf]
        %v420 = vld [vmem:[%s253 + $0x78] sm:$0xf]
        %v421 = vld [vmem:[%s253 + $0x7c] sm:$0xf]
        %v422 = vld [vmem:[%s253 + $0x80] sm:$0xf]
        %v423 = vld [vmem:[%s253 + $0x84] sm:$0xf]
        %v424 = vld [vmem:[%s253 + $0x88] sm:$0xf]
        %v425 = vld [vmem:[%s253 + $0x8c] sm:$0xf]
        %v426 = vld [vmem:[%s253 + $0x90] sm:$0xf]
        %v427 = vld [vmem:[%s253 + $0x94] sm:$0xf]
        %v428 = vld [vmem:[%s253 + $0x98] sm:$0xf]
        %v429 = vld [vmem:[%s253 + $0x9c] sm:$0xf]
        %v430 = vld [vmem:[%s253 + $0xa0] sm:$0xf]
        %v431 = vld [vmem:[%s253 + $0xa4] sm:$0xf]
        %v432 = vld [vmem:[%s253 + $0xa8] sm:$0xf]
        %v433 = vld [vmem:[%s253 + $0xac] sm:$0xf]
        %v434 = vld [vmem:[%s253 + $0xb0] sm:$0xf]
        %v435 = vld [vmem:[%s253 + $0xb4] sm:$0xf]
        %v436 = vld [vmem:[%s253 + $0xb8] sm:$0xf]
        %v437 = vld [vmem:[%s253 + $0xbc] sm:$0xf]
        %v438 = vld [vmem:[%s253 + $0xc0] sm:$0xf]
        %v439 = vld [vmem:[%s253 + $0xc4] sm:$0xf]
        %v440 = vld [vmem:[%s253 + $0xc8] sm:$0xf]
        %v441 = vld [vmem:[%s253 + $0xcc] sm:$0xf]
        %v442 = vld [vmem:[%s253 + $0xd0] sm:$0xf]
        %v443 = vld [vmem:[%s253 + $0xd4] sm:$0xf]
        %v444 = vld [vmem:[%s253 + $0xd8] sm:$0xf]
        %v445 = vld [vmem:[%s253 + $0xdc] sm:$0xf]
        %v574 = vunpack.c.l.b16 %v262
        %v575 = vunpack.c.h.b16 %v262
        %v576 = vunpack.c.l.b16 %v263
        %v577 = vunpack.c.h.b16 %v263
        %v578 = vunpack.c.l.b16 %v264
        %v579 = vunpack.c.h.b16 %v264
        %v580 = vunpack.c.l.b16 %v265
        %v581 = vunpack.c.h.b16 %v265
        %v582 = vunpack.c.l.b16 %v266
        %v583 = vunpack.c.h.b16 %v266
        %v584 = vunpack.c.l.b16 %v267
        %v585 = vunpack.c.h.b16 %v267
        %v586 = vunpack.c.l.b16 %v268
        %v587 = vunpack.c.h.b16 %v268
        %v588 = vunpack.c.l.b16 %v269
        %v589 = vunpack.c.h.b16 %v269
        %v590 = vunpack.c.l.b16 %v270
        %v591 = vunpack.c.h.b16 %v270
        %v592 = vunpack.c.l.b16 %v271
        %v593 = vunpack.c.h.b16 %v271
        %v594 = vunpack.c.l.b16 %v272
        %v595 = vunpack.c.h.b16 %v272
        %v596 = vunpack.c.l.b16 %v273
        %v597 = vunpack.c.h.b16 %v273
        %v598 = vunpack.c.l.b16 %v274
        %v599 = vunpack.c.h.b16 %v274
        %v600 = vunpack.c.l.b16 %v275
        %v601 = vunpack.c.h.b16 %v275
        %v602 = vunpack.c.l.b16 %v276
        %v603 = vunpack.c.h.b16 %v276
        %v604 = vunpack.c.l.b16 %v277
        %v605 = vunpack.c.h.b16 %v277
        %v606 = vunpack.c.l.b16 %v278
        %v607 = vunpack.c.h.b16 %v278
        %v608 = vunpack.c.l.b16 %v279
        %v609 = vunpack.c.h.b16 %v279
        %v610 = vunpack.c.l.b16 %v280
        %v611 = vunpack.c.h.b16 %v280
        %v612 = vunpack.c.l.b16 %v281
        %v613 = vunpack.c.h.b16 %v281
        %v614 = vunpack.c.l.b16 %v282
        %v615 = vunpack.c.h.b16 %v282
        %v616 = vunpack.c.l.b16 %v283
        %v617 = vunpack.c.h.b16 %v283
        %v618 = vunpack.c.l.b16 %v284
        %v619 = vunpack.c.h.b16 %v284
        %v620 = vunpack.c.l.b16 %v285
        %v621 = vunpack.c.h.b16 %v285
        %v622 = vunpack.c.l.b16 %v286
        %v623 = vunpack.c.h.b16 %v286
        %v624 = vunpack.c.l.b16 %v287
        %v625 = vunpack.c.h.b16 %v287
        %v626 = vunpack.c.l.b16 %v288
        %v627 = vunpack.c.h.b16 %v288
        %v628 = vunpack.c.l.b16 %v289
        %v629 = vunpack.c.h.b16 %v289
        %v630 = vunpack.c.l.b16 %v290
        %v631 = vunpack.c.h.b16 %v290
        %v632 = vunpack.c.l.b16 %v291
        %v633 = vunpack.c.h.b16 %v291
        %v634 = vunpack.c.l.b16 %v292
        %v635 = vunpack.c.h.b16 %v292
        %v636 = vunpack.c.l.b16 %v293
        %v637 = vunpack.c.h.b16 %v293
        %v638 = vunpack.c.l.b16 %v294
        %v639 = vunpack.c.h.b16 %v294
        %v640 = vunpack.c.l.b16 %v295
        %v641 = vunpack.c.h.b16 %v295
        %v642 = vunpack.c.l.b16 %v296
        %v643 = vunpack.c.h.b16 %v296
        %v644 = vunpack.c.l.b16 %v297
        %v645 = vunpack.c.h.b16 %v297
        %v646 = vunpack.c.l.b16 %v298
        %v647 = vunpack.c.h.b16 %v298
        %v648 = vunpack.c.l.b16 %v299
        %v649 = vunpack.c.h.b16 %v299
        %v650 = vunpack.c.l.b16 %v300
        %v651 = vunpack.c.h.b16 %v300
        %v652 = vunpack.c.l.b16 %v301
        %v653 = vunpack.c.h.b16 %v301
        %v654 = vunpack.c.l.b16 %v302
        %v655 = vunpack.c.h.b16 %v302
        %v656 = vunpack.c.l.b16 %v303
        %v657 = vunpack.c.h.b16 %v303
        %v658 = vunpack.c.l.b16 %v304
        %v659 = vunpack.c.h.b16 %v304
        %v660 = vunpack.c.l.b16 %v305
        %v661 = vunpack.c.h.b16 %v305
        %v662 = vunpack.c.l.b16 %v306
        %v663 = vunpack.c.h.b16 %v306
        %v664 = vunpack.c.l.b16 %v307
        %v665 = vunpack.c.h.b16 %v307
        %v666 = vunpack.c.l.b16 %v308
        %v667 = vunpack.c.h.b16 %v308
        %v668 = vunpack.c.l.b16 %v309
        %v669 = vunpack.c.h.b16 %v309
        %v670 = vunpack.c.l.b16 %v310
        %v671 = vunpack.c.h.b16 %v310
        %v672 = vunpack.c.l.b16 %v311
        %v673 = vunpack.c.h.b16 %v311
        %v674 = vunpack.c.l.b16 %v312
        %v675 = vunpack.c.h.b16 %v312
        %v676 = vunpack.c.l.b16 %v313
        %v677 = vunpack.c.h.b16 %v313
        %v678 = vunpack.c.l.b16 %v314
        %v679 = vunpack.c.h.b16 %v314
        %v680 = vunpack.c.l.b16 %v315
        %v681 = vunpack.c.h.b16 %v315
        %v682 = vunpack.c.l.b16 %v316
        %v683 = vunpack.c.h.b16 %v316
        %v684 = vunpack.c.l.b16 %v317
        %v685 = vunpack.c.h.b16 %v317
        %v686 = vunpack.c.l.b16 %v318
        %v687 = vunpack.c.h.b16 %v318
        %v688 = vunpack.c.l.b16 %v319
        %v689 = vunpack.c.h.b16 %v319
        %v690 = vunpack.c.l.b16 %v320
        %v691 = vunpack.c.h.b16 %v320
        %v692 = vunpack.c.l.b16 %v321
        %v693 = vunpack.c.h.b16 %v321
        %v694 = vunpack.c.l.b16 %v322
        %v695 = vunpack.c.h.b16 %v322
        %v696 = vunpack.c.l.b16 %v323
        %v697 = vunpack.c.h.b16 %v323
        %v698 = vunpack.c.l.b16 %v324
        %v699 = vunpack.c.h.b16 %v324
        %v700 = vunpack.c.l.b16 %v325
        %v701 = vunpack.c.h.b16 %v325
        %v702 = vunpack.c.l.b16 %v326
        %v703 = vunpack.c.h.b16 %v326
        %v704 = vunpack.c.l.b16 %v327
        %v705 = vunpack.c.h.b16 %v327
        %v706 = vunpack.c.l.b16 %v328
        %v707 = vunpack.c.h.b16 %v328
        %v708 = vunpack.c.l.b16 %v329
        %v709 = vunpack.c.h.b16 %v329
        %v710 = vunpack.c.l.b16 %v330
        %v711 = vunpack.c.h.b16 %v330
        %v712 = vunpack.c.l.b16 %v331
        %v713 = vunpack.c.h.b16 %v331
        %v714 = vunpack.c.l.b16 %v332
        %v715 = vunpack.c.h.b16 %v332
        %v716 = vunpack.c.l.b16 %v333
        %v717 = vunpack.c.h.b16 %v333
        %v718 = vunpack.c.l.b16 %v334
        %v719 = vunpack.c.h.b16 %v334
        %v720 = vunpack.c.l.b16 %v335
        %v721 = vunpack.c.h.b16 %v335
        %v722 = vunpack.c.l.b16 %v336
        %v723 = vunpack.c.h.b16 %v336
        %v724 = vunpack.c.l.b16 %v337
        %v725 = vunpack.c.h.b16 %v337
        %v726 = vunpack.c.l.b16 %v338
        %v727 = vunpack.c.h.b16 %v338
        %v728 = vunpack.c.l.b16 %v339
        %v729 = vunpack.c.h.b16 %v339
        %v730 = vunpack.c.l.b16 %v340
        %v731 = vunpack.c.h.b16 %v340
        %v732 = vunpack.c.l.b16 %v341
        %v733 = vunpack.c.h.b16 %v341
        %v734 = vunpack.c.l.b16 %v342
        %v735 = vunpack.c.h.b16 %v342
        %v736 = vunpack.c.l.b16 %v343
        %v737 = vunpack.c.h.b16 %v343
        %v738 = vunpack.c.l.b16 %v344
        %v739 = vunpack.c.h.b16 %v344
        %v740 = vunpack.c.l.b16 %v345
        %v741 = vunpack.c.h.b16 %v345
        %v742 = vunpack.c.l.b16 %v346
        %v743 = vunpack.c.h.b16 %v346
        %v744 = vunpack.c.l.b16 %v347
        %v745 = vunpack.c.h.b16 %v347
        %v746 = vunpack.c.l.b16 %v348
        %v747 = vunpack.c.h.b16 %v348
        %v748 = vunpack.c.l.b16 %v349
        %v749 = vunpack.c.h.b16 %v349
        %v750 = vunpack.c.l.b16 %v350
        %v751 = vunpack.c.h.b16 %v350
        %v752 = vunpack.c.l.b16 %v351
        %v753 = vunpack.c.h.b16 %v351
        %v754 = vunpack.c.l.b16 %v352
        %v755 = vunpack.c.h.b16 %v352
        %v756 = vunpack.c.l.b16 %v353
        %v757 = vunpack.c.h.b16 %v353
        %v758 = vunpack.c.l.b16 %v354
        %v759 = vunpack.c.h.b16 %v354
        %v760 = vunpack.c.l.b16 %v355
        %v761 = vunpack.c.h.b16 %v355
        %v762 = vunpack.c.l.b16 %v356
        %v763 = vunpack.c.h.b16 %v356
        %v764 = vunpack.c.l.b16 %v357
        %v765 = vunpack.c.h.b16 %v357
        %v766 = vunpack.c.l.b16 %v358
        %v767 = vunpack.c.h.b16 %v358
        %v768 = vunpack.c.l.b16 %v359
        %v769 = vunpack.c.h.b16 %v359
        %v770 = vunpack.c.l.b16 %v360
        %v771 = vunpack.c.h.b16 %v360
        %v772 = vunpack.c.l.b16 %v361
        %v773 = vunpack.c.h.b16 %v361
        %v774 = vunpack.c.l.b16 %v362
        %v775 = vunpack.c.h.b16 %v362
        %v776 = vunpack.c.l.b16 %v363
        %v777 = vunpack.c.h.b16 %v363
        %v778 = vunpack.c.l.b16 %v364
        %v779 = vunpack.c.h.b16 %v364
        %v780 = vunpack.c.l.b16 %v365
        %v781 = vunpack.c.h.b16 %v365
        %v782 = vunpack.c.l.b16 %v366
        %v783 = vunpack.c.h.b16 %v366
        %v784 = vunpack.c.l.b16 %v367
        %v785 = vunpack.c.h.b16 %v367
        %v786 = vunpack.c.l.b16 %v368
        %v787 = vunpack.c.h.b16 %v368
        %v788 = vunpack.c.l.b16 %v369
        %v789 = vunpack.c.h.b16 %v369
        %v790 = vunpack.c.l.b16 %v370
        %v791 = vunpack.c.h.b16 %v370
        %v792 = vunpack.c.l.b16 %v371
        %v793 = vunpack.c.h.b16 %v371
        %v794 = vunpack.c.l.b16 %v372
        %v795 = vunpack.c.h.b16 %v372
        %v796 = vunpack.c.l.b16 %v373
        %v797 = vunpack.c.h.b16 %v373
        %v798 = vunpack.c.l.b16 %v374
        %v799 = vunpack.c.h.b16 %v374
        %v800 = vunpack.c.l.b16 %v375
        %v801 = vunpack.c.h.b16 %v375
        %v802 = vunpack.c.l.b16 %v376
        %v803 = vunpack.c.h.b16 %v376
        %v804 = vunpack.c.l.b16 %v377
        %v805 = vunpack.c.h.b16 %v377
        %v806 = vunpack.c.l.b16 %v378
        %v807 = vunpack.c.h.b16 %v378
        %v808 = vunpack.c.l.b16 %v379
        %v809 = vunpack.c.h.b16 %v379
        %v810 = vunpack.c.l.b16 %v380
        %v811 = vunpack.c.h.b16 %v380
        %v812 = vunpack.c.l.b16 %v381
        %v813 = vunpack.c.h.b16 %v381
        %v814 = vunpack.c.l.b16 %v382
        %v815 = vunpack.c.h.b16 %v382
        %v816 = vunpack.c.l.b16 %v383
        %v817 = vunpack.c.h.b16 %v383
        %v818 = vunpack.c.l.b16 %v384
        %v819 = vunpack.c.h.b16 %v384
        %v820 = vunpack.c.l.b16 %v385
        %v821 = vunpack.c.h.b16 %v385
        %v822 = vunpack.c.l.b16 %v386
        %v823 = vunpack.c.h.b16 %v386
        %v824 = vunpack.c.l.b16 %v387
        %v825 = vunpack.c.h.b16 %v387
        %v826 = vunpack.c.l.b16 %v388
        %v827 = vunpack.c.h.b16 %v388
        %v828 = vunpack.c.l.b16 %v389
        %v829 = vunpack.c.h.b16 %v389
        %v830 = vpack.c.b16 %v578, %v574
        %v831 = vpack.c.b16 %v579, %v575
        %v832 = vpack.c.b16 %v580, %v576
        %v833 = vpack.c.b16 %v581, %v577
        %v834 = vpack.c.b16 %v586, %v582
        %v835 = vpack.c.b16 %v587, %v583
        %v836 = vpack.c.b16 %v588, %v584
        %v837 = vpack.c.b16 %v589, %v585
        %v838 = vpack.c.b16 %v594, %v590
        %v839 = vpack.c.b16 %v595, %v591
        %v840 = vpack.c.b16 %v596, %v592
        %v841 = vpack.c.b16 %v597, %v593
        %v842 = vpack.c.b16 %v602, %v598
        %v843 = vpack.c.b16 %v603, %v599
        %v844 = vpack.c.b16 %v604, %v600
        %v845 = vpack.c.b16 %v605, %v601
        %v846 = vpack.c.b16 %v610, %v606
        %v847 = vpack.c.b16 %v611, %v607
        %v848 = vpack.c.b16 %v612, %v608
        %v849 = vpack.c.b16 %v613, %v609
        %v850 = vpack.c.b16 %v618, %v614
        %v851 = vpack.c.b16 %v619, %v615
        %v852 = vpack.c.b16 %v620, %v616
        %v853 = vpack.c.b16 %v621, %v617
        %v854 = vpack.c.b16 %v626, %v622
        %v855 = vpack.c.b16 %v627, %v623
        %v856 = vpack.c.b16 %v628, %v624
        %v857 = vpack.c.b16 %v629, %v625
        %v858 = vpack.c.b16 %v634, %v630
        %v859 = vpack.c.b16 %v635, %v631
        %v860 = vpack.c.b16 %v636, %v632
        %v861 = vpack.c.b16 %v637, %v633
        %v862 = vpack.c.b16 %v642, %v638
        %v863 = vpack.c.b16 %v643, %v639
        %v864 = vpack.c.b16 %v644, %v640
        %v865 = vpack.c.b16 %v645, %v641
        %v866 = vpack.c.b16 %v650, %v646
        %v867 = vpack.c.b16 %v651, %v647
        %v868 = vpack.c.b16 %v652, %v648
        %v869 = vpack.c.b16 %v653, %v649
        %v870 = vpack.c.b16 %v658, %v654
        %v871 = vpack.c.b16 %v659, %v655
        %v872 = vpack.c.b16 %v660, %v656
        %v873 = vpack.c.b16 %v661, %v657
        %v874 = vpack.c.b16 %v666, %v662
        %v875 = vpack.c.b16 %v667, %v663
        %v876 = vpack.c.b16 %v668, %v664
        %v877 = vpack.c.b16 %v669, %v665
        %v878 = vpack.c.b16 %v674, %v670
        %v879 = vpack.c.b16 %v675, %v671
        %v880 = vpack.c.b16 %v676, %v672
        %v881 = vpack.c.b16 %v677, %v673
        %v882 = vpack.c.b16 %v682, %v678
        %v883 = vpack.c.b16 %v683, %v679
        %v884 = vpack.c.b16 %v684, %v680
        %v885 = vpack.c.b16 %v685, %v681
        %v886 = vpack.c.b16 %v690, %v686
        %v887 = vpack.c.b16 %v691, %v687
        %v888 = vpack.c.b16 %v692, %v688
        %v889 = vpack.c.b16 %v693, %v689
        %v890 = vpack.c.b16 %v698, %v694
        %v891 = vpack.c.b16 %v699, %v695
        %v892 = vpack.c.b16 %v700, %v696
        %v893 = vpack.c.b16 %v701, %v697
        %v894 = vpack.c.b16 %v706, %v702
        %v895 = vpack.c.b16 %v707, %v703
        %v896 = vpack.c.b16 %v708, %v704
        %v897 = vpack.c.b16 %v709, %v705
        %v898 = vpack.c.b16 %v714, %v710
        %v899 = vpack.c.b16 %v715, %v711
        %v900 = vpack.c.b16 %v716, %v712
        %v901 = vpack.c.b16 %v717, %v713
        %v902 = vpack.c.b16 %v722, %v718
        %v903 = vpack.c.b16 %v723, %v719
        %v904 = vpack.c.b16 %v724, %v720
        %v905 = vpack.c.b16 %v725, %v721
        %v906 = vpack.c.b16 %v730, %v726
        %v907 = vpack.c.b16 %v731, %v727
        %v908 = vpack.c.b16 %v732, %v728
        %v909 = vpack.c.b16 %v733, %v729
        %v910 = vpack.c.b16 %v738, %v734
        %v911 = vpack.c.b16 %v739, %v735
        %v912 = vpack.c.b16 %v740, %v736
        %v913 = vpack.c.b16 %v741, %v737
        %v914 = vpack.c.b16 %v746, %v742
        %v915 = vpack.c.b16 %v747, %v743
        %v916 = vpack.c.b16 %v748, %v744
        %v917 = vpack.c.b16 %v749, %v745
        %v918 = vpack.c.b16 %v754, %v750
        %v919 = vpack.c.b16 %v755, %v751
        %v920 = vpack.c.b16 %v756, %v752
        %v921 = vpack.c.b16 %v757, %v753
        %v922 = vpack.c.b16 %v762, %v758
        %v923 = vpack.c.b16 %v763, %v759
        %v924 = vpack.c.b16 %v764, %v760
        %v925 = vpack.c.b16 %v765, %v761
        %v926 = vpack.c.b16 %v770, %v766
        %v927 = vpack.c.b16 %v771, %v767
        %v928 = vpack.c.b16 %v772, %v768
        %v929 = vpack.c.b16 %v773, %v769
        %v930 = vpack.c.b16 %v778, %v774
        %v931 = vpack.c.b16 %v779, %v775
        %v932 = vpack.c.b16 %v780, %v776
        %v933 = vpack.c.b16 %v781, %v777
        %v934 = vpack.c.b16 %v786, %v782
        %v935 = vpack.c.b16 %v787, %v783
        %v936 = vpack.c.b16 %v788, %v784
        %v937 = vpack.c.b16 %v789, %v785
        %v938 = vpack.c.b16 %v794, %v790
        %v939 = vpack.c.b16 %v795, %v791
        %v940 = vpack.c.b16 %v796, %v792
        %v941 = vpack.c.b16 %v797, %v793
        %v942 = vpack.c.b16 %v802, %v798
        %v943 = vpack.c.b16 %v803, %v799
        %v944 = vpack.c.b16 %v804, %v800
        %v945 = vpack.c.b16 %v805, %v801
        %v946 = vpack.c.b16 %v810, %v806
        %v947 = vpack.c.b16 %v811, %v807
        %v948 = vpack.c.b16 %v812, %v808
        %v949 = vpack.c.b16 %v813, %v809
        %v950 = vpack.c.b16 %v818, %v814
        %v951 = vpack.c.b16 %v819, %v815
        %v952 = vpack.c.b16 %v820, %v816
        %v953 = vpack.c.b16 %v821, %v817
        %v954 = vpack.c.b16 %v826, %v822
        %v955 = vpack.c.b16 %v827, %v823
        %v956 = vpack.c.b16 %v828, %v824
        %v957 = vpack.c.b16 %v829, %v825
        %v1110 = vunpack.c.l.b16 %v390
        %v1111 = vunpack.c.l.b16 %v391
        %v1112 = vunpack.c.l.b16 %v392
        %v1113 = vunpack.c.l.b16 %v393
        %v1114 = vunpack.c.l.b16 %v394
        %v1115 = vunpack.c.l.b16 %v395
        %v1116 = vunpack.c.l.b16 %v396
        %v1117 = vunpack.c.l.b16 %v397
        %v1118 = vunpack.c.l.b16 %v398
        %v1119 = vunpack.c.l.b16 %v399
        %v1120 = vunpack.c.l.b16 %v400
        %v1121 = vunpack.c.l.b16 %v401
        %v1122 = vunpack.c.l.b16 %v402
        %v1123 = vunpack.c.l.b16 %v403
        %v1124 = vunpack.c.l.b16 %v404
        %v1125 = vunpack.c.l.b16 %v405
        %v1126 = vunpack.c.l.b16 %v406
        %v1127 = vunpack.c.l.b16 %v407
        %v1128 = vunpack.c.l.b16 %v408
        %v1129 = vunpack.c.l.b16 %v409
        %v1130 = vunpack.c.l.b16 %v410
        %v1131 = vunpack.c.l.b16 %v411
        %v1132 = vunpack.c.l.b16 %v412
        %v1133 = vunpack.c.l.b16 %v413
        %v1134 = vunpack.c.l.b16 %v414
        %v1135 = vunpack.c.l.b16 %v415
        %v1136 = vunpack.c.l.b16 %v416
        %v1137 = vunpack.c.l.b16 %v417
        %v1138 = vunpack.c.l.b16 %v418
        %v1139 = vunpack.c.l.b16 %v419
        %v1140 = vunpack.c.l.b16 %v420
        %v1141 = vunpack.c.l.b16 %v421
        %v1142 = vunpack.c.l.b16 %v422
        %v1143 = vunpack.c.l.b16 %v423
        %v1144 = vunpack.c.l.b16 %v424
        %v1145 = vunpack.c.l.b16 %v425
        %v1146 = vunpack.c.l.b16 %v426
        %v1147 = vunpack.c.l.b16 %v427
        %v1148 = vunpack.c.l.b16 %v428
        %v1149 = vunpack.c.l.b16 %v429
        %v1150 = vunpack.c.l.b16 %v430
        %v1151 = vunpack.c.l.b16 %v431
        %v1152 = vunpack.c.l.b16 %v432
        %v1153 = vunpack.c.l.b16 %v433
        %v1154 = vunpack.c.l.b16 %v434
        %v1155 = vunpack.c.l.b16 %v435
        %v1156 = vunpack.c.l.b16 %v436
        %v1157 = vunpack.c.l.b16 %v437
        %v1158 = vunpack.c.l.b16 %v438
        %v1159 = vunpack.c.l.b16 %v439
        %v1160 = vunpack.c.l.b16 %v440
        %v1161 = vunpack.c.l.b16 %v441
        %v1162 = vunpack.c.l.b16 %v442
        %v1163 = vunpack.c.l.b16 %v443
        %v1164 = vunpack.c.l.b16 %v444
        %v1165 = vunpack.c.l.b16 %v445
        %v1166 = vpack.c.b16 %v1111, %v1110
        %v1167 = vpack.c.b16 %v1113, %v1112
        %v1168 = vpack.c.b16 %v1115, %v1114
        %v1169 = vpack.c.b16 %v1117, %v1116
        %v1170 = vpack.c.b16 %v1119, %v1118
        %v1171 = vpack.c.b16 %v1121, %v1120
        %v1172 = vpack.c.b16 %v1123, %v1122
        %v1173 = vpack.c.b16 %v1125, %v1124
        %v1174 = vpack.c.b16 %v1127, %v1126
        %v1175 = vpack.c.b16 %v1129, %v1128
        %v1176 = vpack.c.b16 %v1131, %v1130
        %v1177 = vpack.c.b16 %v1133, %v1132
        %v1178 = vpack.c.b16 %v1135, %v1134
        %v1179 = vpack.c.b16 %v1137, %v1136
        %v1180 = vpack.c.b16 %v1139, %v1138
        %v1181 = vpack.c.b16 %v1141, %v1140
        %v1182 = vpack.c.b16 %v1143, %v1142
        %v1183 = vpack.c.b16 %v1145, %v1144
        %v1184 = vpack.c.b16 %v1147, %v1146
        %v1185 = vpack.c.b16 %v1149, %v1148
        %v1186 = vpack.c.b16 %v1151, %v1150
        %v1187 = vpack.c.b16 %v1153, %v1152
        %v1188 = vpack.c.b16 %v1155, %v1154
        %v1189 = vpack.c.b16 %v1157, %v1156
        %v1190 = vpack.c.b16 %v1159, %v1158
        %v1191 = vpack.c.b16 %v1161, %v1160
        %v1192 = vpack.c.b16 %v1163, %v1162
        %v1193 = vpack.c.b16 %v1165, %v1164
        %vm1222 = vcmask 523264
        %v1224 = vsel %vm1222, %v833, 0
        %v1227 = vsel %vm1222, %v837, 0
        %v1230 = vsel %vm1222, %v841, 0
        %v1233 = vsel %vm1222, %v845, 0
        %v1236 = vsel %vm1222, %v849, 0
        %v1239 = vsel %vm1222, %v853, 0
        %v1242 = vsel %vm1222, %v857, 0
        %v1245 = vsel %vm1222, %v861, 0
        %v1248 = vsel %vm1222, %v865, 0
        %v1251 = vsel %vm1222, %v869, 0
        %v1254 = vsel %vm1222, %v873, 0
        %v1257 = vsel %vm1222, %v877, 0
        %v1260 = vsel %vm1222, %v881, 0
        %v1263 = vsel %vm1222, %v885, 0
        %v1266 = vsel %vm1222, %v889, 0
        %v1269 = vsel %vm1222, %v893, 0
        %v1272 = vsel %vm1222, %v897, 0
        %v1275 = vsel %vm1222, %v901, 0
        %v1278 = vsel %vm1222, %v905, 0
        %v1281 = vsel %vm1222, %v909, 0
        %v1284 = vsel %vm1222, %v913, 0
        %v1287 = vsel %vm1222, %v917, 0
        %v1290 = vsel %vm1222, %v921, 0
        %v1293 = vsel %vm1222, %v925, 0
        %v1296 = vsel %vm1222, %v929, 0
        %v1299 = vsel %vm1222, %v933, 0
        %v1302 = vsel %vm1222, %v937, 0
        %v1305 = vsel %vm1222, %v941, 0
        %v1308 = vsel %vm1222, %v945, 0
        %v1311 = vsel %vm1222, %v949, 0
        %v1314 = vsel %vm1222, %v953, 0
        %v1317 = vsel %vm1222, %v957, 0
        %1319 = vmatprep.subr.bf16.mxu0 0
        %1320 = vmatpush1.bf16.msra.mxu0 %v1173
        %1321 = vmatprep.subr.bf16.mxu0 0
        %1322 = vmatpush1.bf16.msra.mxu0 %v1172
        %1323 = vmatprep.subr.bf16.mxu0 0
        %1324 = vmatpush1.bf16.msra.mxu0 %v1171
        %1325 = vmatprep.subr.bf16.mxu0 0
        %1326 = vmatpush1.bf16.msra.mxu0 %v1170
        %1327 = vmatprep.subr.bf16.mxu0 0
        %1328 = vmatpush1.bf16.msra.mxu0 %v1169
        %1329 = vmatprep.subr.bf16.mxu0 0
        %1330 = vmatpush1.bf16.msra.mxu0 %v1168
        %1331 = vmatprep.subr.bf16.mxu0 0
        %1332 = vmatpush1.bf16.msra.mxu0 %v1167
        %1333 = vmatprep.subr.bf16.mxu0 0
        %1334 = vmatpush1.bf16.msra.mxu0 %v1166
        %1335 = vmatprep.subr.bf16.mxu0 0
        %1336 = vmatpush2.bf16.msra.mxu0 %v1181
        %1337 = vmatprep.subr.bf16.mxu0 0
        %1338 = vmatpush2.bf16.msra.mxu0 %v1180
        %1339 = vmatprep.subr.bf16.mxu0 0
        %1340 = vmatpush2.bf16.msra.mxu0 %v1179
        %1341 = vmatprep.subr.bf16.mxu0 0
        %1342 = vmatpush2.bf16.msra.mxu0 %v1178
        %1343 = vmatprep.subr.bf16.mxu0 0
        %1344 = vmatpush2.bf16.msra.mxu0 %v1177
        %1345 = vmatprep.subr.bf16.mxu0 0
        %1346 = vmatpush2.bf16.msra.mxu0 %v1176
        %1347 = vmatprep.subr.bf16.mxu0 0
        %1348 = vmatpush2.bf16.msra.mxu0 %v1175
        %1349 = vmatprep.subr.bf16.mxu0 0
        %1350 = vmatpush2.bf16.msra.mxu0 %v1174
        %1351 = vmatprep.mubr.bf16.mxu0 %v831
        %1352 = vmatmul.mubr.bf16.gmra.mxu0 %v830
        %v1353 = vpop.f32.mrf.mxu0
        %v1354 = vadd.f32 0.0, %v1353
        %v1355 = vpop.f32.mrf.mxu0
        %v1356 = vpop.f32.mrf.mxu0
        %v1357 = vadd.f32 0.0, %v1356
        %v1358 = vpop.f32.mrf.mxu0
        %1359 = vmatprep.mubr.bf16.mxu0 %v835
        %1360 = vmatmul.mubr.bf16.gmra.mxu0 %v834
        %v1361 = vpop.f32.mrf.mxu0
        %v1362 = vadd.f32 0.0, %v1361
        %v1363 = vpop.f32.mrf.mxu0
        %v1364 = vpop.f32.mrf.mxu0
        %v1365 = vadd.f32 0.0, %v1364
        %v1366 = vpop.f32.mrf.mxu0
        %1367 = vmatprep.mubr.bf16.mxu0 %v839
        %1368 = vmatmul.mubr.bf16.gmra.mxu0 %v838
        %v1369 = vpop.f32.mrf.mxu0
        %v1370 = vadd.f32 0.0, %v1369
        %v1371 = vpop.f32.mrf.mxu0
        %v1372 = vpop.f32.mrf.mxu0
        %v1373 = vadd.f32 0.0, %v1372
        %v1374 = vpop.f32.mrf.mxu0
        %1375 = vmatprep.mubr.bf16.mxu0 %v843
        %1376 = vmatmul.mubr.bf16.gmra.mxu0 %v842
        %v1377 = vpop.f32.mrf.mxu0
        %v1378 = vadd.f32 0.0, %v1377
        %v1379 = vpop.f32.mrf.mxu0
        %v1380 = vpop.f32.mrf.mxu0
        %v1381 = vadd.f32 0.0, %v1380
        %v1382 = vpop.f32.mrf.mxu0
        %1383 = vmatprep.mubr.bf16.mxu0 %v847
        %1384 = vmatmul.mubr.bf16.gmra.mxu0 %v846
        %v1385 = vpop.f32.mrf.mxu0
        %v1386 = vadd.f32 0.0, %v1385
        %v1387 = vpop.f32.mrf.mxu0
        %v1388 = vpop.f32.mrf.mxu0
        %v1389 = vadd.f32 0.0, %v1388
        %v1390 = vpop.f32.mrf.mxu0
        %1391 = vmatprep.mubr.bf16.mxu0 %v851
        %1392 = vmatmul.mubr.bf16.gmra.mxu0 %v850
        %v1393 = vpop.f32.mrf.mxu0
        %v1394 = vadd.f32 0.0, %v1393
        %v1395 = vpop.f32.mrf.mxu0
        %v1396 = vpop.f32.mrf.mxu0
        %v1397 = vadd.f32 0.0, %v1396
        %v1398 = vpop.f32.mrf.mxu0
        %1399 = vmatprep.mubr.bf16.mxu0 %v855
        %1400 = vmatmul.mubr.bf16.gmra.mxu0 %v854
        %v1401 = vpop.f32.mrf.mxu0
        %v1402 = vadd.f32 0.0, %v1401
        %v1403 = vpop.f32.mrf.mxu0
        %v1404 = vpop.f32.mrf.mxu0
        %v1405 = vadd.f32 0.0, %v1404
        %v1406 = vpop.f32.mrf.mxu0
        %1407 = vmatprep.mubr.bf16.mxu0 %v859
        %1408 = vmatmul.mubr.bf16.gmra.mxu0 %v858
        %v1409 = vpop.f32.mrf.mxu0
        %v1410 = vadd.f32 0.0, %v1409
        %v1411 = vpop.f32.mrf.mxu0
        %v1412 = vpop.f32.mrf.mxu0
        %v1413 = vadd.f32 0.0, %v1412
        %v1414 = vpop.f32.mrf.mxu0
        %1415 = vmatprep.mubr.bf16.mxu0 %v863
        %1416 = vmatmul.mubr.bf16.gmra.mxu0 %v862
        %v1417 = vpop.f32.mrf.mxu0
        %v1418 = vadd.f32 0.0, %v1417
        %v1419 = vpop.f32.mrf.mxu0
        %v1420 = vpop.f32.mrf.mxu0
        %v1421 = vadd.f32 0.0, %v1420
        %v1422 = vpop.f32.mrf.mxu0
        %1423 = vmatprep.mubr.bf16.mxu0 %v867
        %1424 = vmatmul.mubr.bf16.gmra.mxu0 %v866
        %v1425 = vpop.f32.mrf.mxu0
        %v1426 = vadd.f32 0.0, %v1425
        %v1427 = vpop.f32.mrf.mxu0
        %v1428 = vpop.f32.mrf.mxu0
        %v1429 = vadd.f32 0.0, %v1428
        %v1430 = vpop.f32.mrf.mxu0
        %1431 = vmatprep.mubr.bf16.mxu0 %v871
        %1432 = vmatmul.mubr.bf16.gmra.mxu0 %v870
        %v1433 = vpop.f32.mrf.mxu0
        %v1434 = vadd.f32 0.0, %v1433
        %v1435 = vpop.f32.mrf.mxu0
        %v1436 = vpop.f32.mrf.mxu0
        %v1437 = vadd.f32 0.0, %v1436
        %v1438 = vpop.f32.mrf.mxu0
        %1439 = vmatprep.mubr.bf16.mxu0 %v875
        %1440 = vmatmul.mubr.bf16.gmra.mxu0 %v874
        %v1441 = vpop.f32.mrf.mxu0
        %v1442 = vadd.f32 0.0, %v1441
        %v1443 = vpop.f32.mrf.mxu0
        %v1444 = vpop.f32.mrf.mxu0
        %v1445 = vadd.f32 0.0, %v1444
        %v1446 = vpop.f32.mrf.mxu0
        %1447 = vmatprep.mubr.bf16.mxu0 %v879
        %1448 = vmatmul.mubr.bf16.gmra.mxu0 %v878
        %v1449 = vpop.f32.mrf.mxu0
        %v1450 = vadd.f32 0.0, %v1449
        %v1451 = vpop.f32.mrf.mxu0
        %v1452 = vpop.f32.mrf.mxu0
        %v1453 = vadd.f32 0.0, %v1452
        %v1454 = vpop.f32.mrf.mxu0
        %1455 = vmatprep.mubr.bf16.mxu0 %v883
        %1456 = vmatmul.mubr.bf16.gmra.mxu0 %v882
        %v1457 = vpop.f32.mrf.mxu0
        %v1458 = vadd.f32 0.0, %v1457
        %v1459 = vpop.f32.mrf.mxu0
        %v1460 = vpop.f32.mrf.mxu0
        %v1461 = vadd.f32 0.0, %v1460
        %v1462 = vpop.f32.mrf.mxu0
        %1463 = vmatprep.mubr.bf16.mxu0 %v887
        %1464 = vmatmul.mubr.bf16.gmra.mxu0 %v886
        %v1465 = vpop.f32.mrf.mxu0
        %v1466 = vadd.f32 0.0, %v1465
        %v1467 = vpop.f32.mrf.mxu0
        %v1468 = vpop.f32.mrf.mxu0
        %v1469 = vadd.f32 0.0, %v1468
        %v1470 = vpop.f32.mrf.mxu0
        %1471 = vmatprep.mubr.bf16.mxu0 %v891
        %1472 = vmatmul.mubr.bf16.gmra.mxu0 %v890
        %v1473 = vpop.f32.mrf.mxu0
        %v1474 = vadd.f32 0.0, %v1473
        %v1475 = vpop.f32.mrf.mxu0
        %v1476 = vpop.f32.mrf.mxu0
        %v1477 = vadd.f32 0.0, %v1476
        %v1478 = vpop.f32.mrf.mxu0
        %1479 = vmatprep.mubr.bf16.mxu0 %v895
        %1480 = vmatmul.mubr.bf16.gmra.mxu0 %v894
        %v1481 = vpop.f32.mrf.mxu0
        %v1482 = vadd.f32 0.0, %v1481
        %v1483 = vpop.f32.mrf.mxu0
        %v1484 = vpop.f32.mrf.mxu0
        %v1485 = vadd.f32 0.0, %v1484
        %v1486 = vpop.f32.mrf.mxu0
        %1487 = vmatprep.mubr.bf16.mxu0 %v899
        %1488 = vmatmul.mubr.bf16.gmra.mxu0 %v898
        %v1489 = vpop.f32.mrf.mxu0
        %v1490 = vadd.f32 0.0, %v1489
        %v1491 = vpop.f32.mrf.mxu0
        %v1492 = vpop.f32.mrf.mxu0
        %v1493 = vadd.f32 0.0, %v1492
        %v1494 = vpop.f32.mrf.mxu0
        %1495 = vmatprep.mubr.bf16.mxu0 %v903
        %1496 = vmatmul.mubr.bf16.gmra.mxu0 %v902
        %v1497 = vpop.f32.mrf.mxu0
        %v1498 = vadd.f32 0.0, %v1497
        %v1499 = vpop.f32.mrf.mxu0
        %v1500 = vpop.f32.mrf.mxu0
        %v1501 = vadd.f32 0.0, %v1500
        %v1502 = vpop.f32.mrf.mxu0
        %1503 = vmatprep.mubr.bf16.mxu0 %v907
        %1504 = vmatmul.mubr.bf16.gmra.mxu0 %v906
        %v1505 = vpop.f32.mrf.mxu0
        %v1506 = vadd.f32 0.0, %v1505
        %v1507 = vpop.f32.mrf.mxu0
        %v1508 = vpop.f32.mrf.mxu0
        %v1509 = vadd.f32 0.0, %v1508
        %v1510 = vpop.f32.mrf.mxu0
        %1511 = vmatprep.mubr.bf16.mxu0 %v911
        %1512 = vmatmul.mubr.bf16.gmra.mxu0 %v910
        %v1513 = vpop.f32.mrf.mxu0
        %v1514 = vadd.f32 0.0, %v1513
        %v1515 = vpop.f32.mrf.mxu0
        %v1516 = vpop.f32.mrf.mxu0
        %v1517 = vadd.f32 0.0, %v1516
        %v1518 = vpop.f32.mrf.mxu0
        %1519 = vmatprep.mubr.bf16.mxu0 %v915
        %1520 = vmatmul.mubr.bf16.gmra.mxu0 %v914
        %v1521 = vpop.f32.mrf.mxu0
        %v1522 = vadd.f32 0.0, %v1521
        %v1523 = vpop.f32.mrf.mxu0
        %v1524 = vpop.f32.mrf.mxu0
        %v1525 = vadd.f32 0.0, %v1524
        %v1526 = vpop.f32.mrf.mxu0
        %1527 = vmatprep.mubr.bf16.mxu0 %v919
        %1528 = vmatmul.mubr.bf16.gmra.mxu0 %v918
        %v1529 = vpop.f32.mrf.mxu0
        %v1530 = vadd.f32 0.0, %v1529
        %v1531 = vpop.f32.mrf.mxu0
        %v1532 = vpop.f32.mrf.mxu0
        %v1533 = vadd.f32 0.0, %v1532
        %v1534 = vpop.f32.mrf.mxu0
        %1535 = vmatprep.mubr.bf16.mxu0 %v923
        %1536 = vmatmul.mubr.bf16.gmra.mxu0 %v922
        %v1537 = vpop.f32.mrf.mxu0
        %v1538 = vadd.f32 0.0, %v1537
        %v1539 = vpop.f32.mrf.mxu0
        %v1540 = vpop.f32.mrf.mxu0
        %v1541 = vadd.f32 0.0, %v1540
        %v1542 = vpop.f32.mrf.mxu0
        %1543 = vmatprep.mubr.bf16.mxu0 %v927
        %1544 = vmatmul.mubr.bf16.gmra.mxu0 %v926
        %v1545 = vpop.f32.mrf.mxu0
        %v1546 = vadd.f32 0.0, %v1545
        %v1547 = vpop.f32.mrf.mxu0
        %v1548 = vpop.f32.mrf.mxu0
        %v1549 = vadd.f32 0.0, %v1548
        %v1550 = vpop.f32.mrf.mxu0
        %1551 = vmatprep.mubr.bf16.mxu0 %v931
        %1552 = vmatmul.mubr.bf16.gmra.mxu0 %v930
        %v1553 = vpop.f32.mrf.mxu0
        %v1554 = vadd.f32 0.0, %v1553
        %v1555 = vpop.f32.mrf.mxu0
        %v1556 = vpop.f32.mrf.mxu0
        %v1557 = vadd.f32 0.0, %v1556
        %v1558 = vpop.f32.mrf.mxu0
        %1559 = vmatprep.mubr.bf16.mxu0 %v935
        %1560 = vmatmul.mubr.bf16.gmra.mxu0 %v934
        %v1561 = vpop.f32.mrf.mxu0
        %v1562 = vadd.f32 0.0, %v1561
        %v1563 = vpop.f32.mrf.mxu0
        %v1564 = vpop.f32.mrf.mxu0
        %v1565 = vadd.f32 0.0, %v1564
        %v1566 = vpop.f32.mrf.mxu0
        %1567 = vmatprep.mubr.bf16.mxu0 %v939
        %1568 = vmatmul.mubr.bf16.gmra.mxu0 %v938
        %v1569 = vpop.f32.mrf.mxu0
        %v1570 = vadd.f32 0.0, %v1569
        %v1571 = vpop.f32.mrf.mxu0
        %v1572 = vpop.f32.mrf.mxu0
        %v1573 = vadd.f32 0.0, %v1572
        %v1574 = vpop.f32.mrf.mxu0
        %1575 = vmatprep.mubr.bf16.mxu0 %v943
        %1576 = vmatmul.mubr.bf16.gmra.mxu0 %v942
        %v1577 = vpop.f32.mrf.mxu0
        %v1578 = vadd.f32 0.0, %v1577
        %v1579 = vpop.f32.mrf.mxu0
        %v1580 = vpop.f32.mrf.mxu0
        %v1581 = vadd.f32 0.0, %v1580
        %v1582 = vpop.f32.mrf.mxu0
        %1583 = vmatprep.mubr.bf16.mxu0 %v947
        %1584 = vmatmul.mubr.bf16.gmra.mxu0 %v946
        %v1585 = vpop.f32.mrf.mxu0
        %v1586 = vadd.f32 0.0, %v1585
        %v1587 = vpop.f32.mrf.mxu0
        %v1588 = vpop.f32.mrf.mxu0
        %v1589 = vadd.f32 0.0, %v1588
        %v1590 = vpop.f32.mrf.mxu0
        %1591 = vmatprep.mubr.bf16.mxu0 %v951
        %1592 = vmatmul.mubr.bf16.gmra.mxu0 %v950
        %v1593 = vpop.f32.mrf.mxu0
        %v1594 = vadd.f32 0.0, %v1593
        %v1595 = vpop.f32.mrf.mxu0
        %v1596 = vpop.f32.mrf.mxu0
        %v1597 = vadd.f32 0.0, %v1596
        %v1598 = vpop.f32.mrf.mxu0
        %1599 = vmatprep.mubr.bf16.mxu0 %v955
        %1600 = vmatmul.mubr.bf16.gmra.mxu0 %v954
        %v1601 = vpop.f32.mrf.mxu0
        %v1602 = vadd.f32 0.0, %v1601
        %v1603 = vpop.f32.mrf.mxu0
        %v1604 = vpop.f32.mrf.mxu0
        %v1605 = vadd.f32 0.0, %v1604
        %v1606 = vpop.f32.mrf.mxu0
        %1607 = vdwg.mxu0
        %1608 = vmatprep.subr.bf16.mxu0 0
        %1609 = vmatpush1.bf16.msra.mxu0 %v1189
        %1610 = vmatprep.subr.bf16.mxu0 0
        %1611 = vmatpush1.bf16.msra.mxu0 %v1188
        %1612 = vmatprep.subr.bf16.mxu0 0
        %1613 = vmatpush1.bf16.msra.mxu0 %v1187
        %1614 = vmatprep.subr.bf16.mxu0 0
        %1615 = vmatpush1.bf16.msra.mxu0 %v1186
        %1616 = vmatprep.subr.bf16.mxu0 0
        %1617 = vmatpush1.bf16.msra.mxu0 %v1185
        %1618 = vmatprep.subr.bf16.mxu0 0
        %1619 = vmatpush1.bf16.msra.mxu0 %v1184
        %1620 = vmatprep.subr.bf16.mxu0 0
        %1621 = vmatpush1.bf16.msra.mxu0 %v1183
        %1622 = vmatprep.subr.bf16.mxu0 0
        %1623 = vmatpush1.bf16.msra.mxu0 %v1182
        %1624 = vmatprep.subr.bf16.mxu0 0
        %1625 = vmatpush2.bf16.msra.mxu0 0
        %1626 = vmatprep.subr.bf16.mxu0 0
        %1627 = vmatpush2.bf16.msra.mxu0 0
        %1628 = vmatprep.subr.bf16.mxu0 0
        %1629 = vmatpush2.bf16.msra.mxu0 0
        %1630 = vmatprep.subr.bf16.mxu0 0
        %1631 = vmatpush2.bf16.msra.mxu0 0
        %1632 = vmatprep.subr.bf16.mxu0 0
        %1633 = vmatpush2.bf16.msra.mxu0 %v1193
        %1634 = vmatprep.subr.bf16.mxu0 0
        %1635 = vmatpush2.bf16.msra.mxu0 %v1192
        %1636 = vmatprep.subr.bf16.mxu0 0
        %1637 = vmatpush2.bf16.msra.mxu0 %v1191
        %1638 = vmatprep.subr.bf16.mxu0 0
        %1639 = vmatpush2.bf16.msra.mxu0 %v1190
        %1640 = vmatprep.mubr.bf16.mxu0 %v1224
        %1641 = vmatmul.mubr.bf16.gmra.mxu0 %v832
        %v1642 = vpop.f32.mrf.mxu0
        %v1643 = vadd.f32 %v1354, %v1642
        %v1644 = vpop.f32.mrf.mxu0
        %v1645 = vpop.f32.mrf.mxu0
        %v1646 = vadd.f32 %v1357, %v1645
        %v1647 = vpop.f32.mrf.mxu0
        %1648 = vmatprep.mubr.bf16.mxu0 %v1227
        %1649 = vmatmul.mubr.bf16.gmra.mxu0 %v836
        %v1650 = vpop.f32.mrf.mxu0
        %v1651 = vadd.f32 %v1362, %v1650
        %v1652 = vpop.f32.mrf.mxu0
        %v1653 = vpop.f32.mrf.mxu0
        %v1654 = vadd.f32 %v1365, %v1653
        %v1655 = vpop.f32.mrf.mxu0
        %1656 = vmatprep.mubr.bf16.mxu0 %v1230
        %1657 = vmatmul.mubr.bf16.gmra.mxu0 %v840
        %v1658 = vpop.f32.mrf.mxu0
        %v1659 = vadd.f32 %v1370, %v1658
        %v1660 = vpop.f32.mrf.mxu0
        %v1661 = vpop.f32.mrf.mxu0
        %v1662 = vadd.f32 %v1373, %v1661
        %v1663 = vpop.f32.mrf.mxu0
        %1664 = vmatprep.mubr.bf16.mxu0 %v1233
        %1665 = vmatmul.mubr.bf16.gmra.mxu0 %v844
        %v1666 = vpop.f32.mrf.mxu0
        %v1667 = vadd.f32 %v1378, %v1666
        %v1668 = vpop.f32.mrf.mxu0
        %v1669 = vpop.f32.mrf.mxu0
        %v1670 = vadd.f32 %v1381, %v1669
        %v1671 = vpop.f32.mrf.mxu0
        %1672 = vmatprep.mubr.bf16.mxu0 %v1236
        %1673 = vmatmul.mubr.bf16.gmra.mxu0 %v848
        %v1674 = vpop.f32.mrf.mxu0
        %v1675 = vadd.f32 %v1386, %v1674
        %v1676 = vpop.f32.mrf.mxu0
        %v1677 = vpop.f32.mrf.mxu0
        %v1678 = vadd.f32 %v1389, %v1677
        %v1679 = vpop.f32.mrf.mxu0
        %1680 = vmatprep.mubr.bf16.mxu0 %v1239
        %1681 = vmatmul.mubr.bf16.gmra.mxu0 %v852
        %v1682 = vpop.f32.mrf.mxu0
        %v1683 = vadd.f32 %v1394, %v1682
        %v1684 = vpop.f32.mrf.mxu0
        %v1685 = vpop.f32.mrf.mxu0
        %v1686 = vadd.f32 %v1397, %v1685
        %v1687 = vpop.f32.mrf.mxu0
        %1688 = vmatprep.mubr.bf16.mxu0 %v1242
        %1689 = vmatmul.mubr.bf16.gmra.mxu0 %v856
        %v1690 = vpop.f32.mrf.mxu0
        %v1691 = vadd.f32 %v1402, %v1690
        %v1692 = vpop.f32.mrf.mxu0
        %v1693 = vpop.f32.mrf.mxu0
        %v1694 = vadd.f32 %v1405, %v1693
        %v1695 = vpop.f32.mrf.mxu0
        %1696 = vmatprep.mubr.bf16.mxu0 %v1245
        %1697 = vmatmul.mubr.bf16.gmra.mxu0 %v860
        %v1698 = vpop.f32.mrf.mxu0
        %v1699 = vadd.f32 %v1410, %v1698
        %v1700 = vpop.f32.mrf.mxu0
        %v1701 = vpop.f32.mrf.mxu0
        %v1702 = vadd.f32 %v1413, %v1701
        %v1703 = vpop.f32.mrf.mxu0
        %1704 = vmatprep.mubr.bf16.mxu0 %v1248
        %1705 = vmatmul.mubr.bf16.gmra.mxu0 %v864
        %v1706 = vpop.f32.mrf.mxu0
        %v1707 = vadd.f32 %v1418, %v1706
        %v1708 = vpop.f32.mrf.mxu0
        %v1709 = vpop.f32.mrf.mxu0
        %v1710 = vadd.f32 %v1421, %v1709
        %v1711 = vpop.f32.mrf.mxu0
        %1712 = vmatprep.mubr.bf16.mxu0 %v1251
        %1713 = vmatmul.mubr.bf16.gmra.mxu0 %v868
        %v1714 = vpop.f32.mrf.mxu0
        %v1715 = vadd.f32 %v1426, %v1714
        %v1716 = vpop.f32.mrf.mxu0
        %v1717 = vpop.f32.mrf.mxu0
        %v1718 = vadd.f32 %v1429, %v1717
        %v1719 = vpop.f32.mrf.mxu0
        %1720 = vmatprep.mubr.bf16.mxu0 %v1254
        %1721 = vmatmul.mubr.bf16.gmra.mxu0 %v872
        %v1722 = vpop.f32.mrf.mxu0
        %v1723 = vadd.f32 %v1434, %v1722
        %v1724 = vpop.f32.mrf.mxu0
        %v1725 = vpop.f32.mrf.mxu0
        %v1726 = vadd.f32 %v1437, %v1725
        %v1727 = vpop.f32.mrf.mxu0
        %1728 = vmatprep.mubr.bf16.mxu0 %v1257
        %1729 = vmatmul.mubr.bf16.gmra.mxu0 %v876
        %v1730 = vpop.f32.mrf.mxu0
        %v1731 = vadd.f32 %v1442, %v1730
        %v1732 = vpop.f32.mrf.mxu0
        %v1733 = vpop.f32.mrf.mxu0
        %v1734 = vadd.f32 %v1445, %v1733
        %v1735 = vpop.f32.mrf.mxu0
        %1736 = vmatprep.mubr.bf16.mxu0 %v1260
        %1737 = vmatmul.mubr.bf16.gmra.mxu0 %v880
        %v1738 = vpop.f32.mrf.mxu0
        %v1739 = vadd.f32 %v1450, %v1738
        %v1740 = vpop.f32.mrf.mxu0
        %v1741 = vpop.f32.mrf.mxu0
        %v1742 = vadd.f32 %v1453, %v1741
        %v1743 = vpop.f32.mrf.mxu0
        %1744 = vmatprep.mubr.bf16.mxu0 %v1263
        %1745 = vmatmul.mubr.bf16.gmra.mxu0 %v884
        %v1746 = vpop.f32.mrf.mxu0
        %v1747 = vadd.f32 %v1458, %v1746
        %v1748 = vpop.f32.mrf.mxu0
        %v1749 = vpop.f32.mrf.mxu0
        %v1750 = vadd.f32 %v1461, %v1749
        %v1751 = vpop.f32.mrf.mxu0
        %1752 = vmatprep.mubr.bf16.mxu0 %v1266
        %1753 = vmatmul.mubr.bf16.gmra.mxu0 %v888
        %v1754 = vpop.f32.mrf.mxu0
        %v1755 = vadd.f32 %v1466, %v1754
        %v1756 = vpop.f32.mrf.mxu0
        %v1757 = vpop.f32.mrf.mxu0
        %v1758 = vadd.f32 %v1469, %v1757
        %v1759 = vpop.f32.mrf.mxu0
        %1760 = vmatprep.mubr.bf16.mxu0 %v1269
        %1761 = vmatmul.mubr.bf16.gmra.mxu0 %v892
        %v1762 = vpop.f32.mrf.mxu0
        %v1763 = vadd.f32 %v1474, %v1762
        %v1764 = vpop.f32.mrf.mxu0
        %v1765 = vpop.f32.mrf.mxu0
        %v1766 = vadd.f32 %v1477, %v1765
        %v1767 = vpop.f32.mrf.mxu0
        %1768 = vmatprep.mubr.bf16.mxu0 %v1272
        %1769 = vmatmul.mubr.bf16.gmra.mxu0 %v896
        %v1770 = vpop.f32.mrf.mxu0
        %v1771 = vadd.f32 %v1482, %v1770
        %v1772 = vpop.f32.mrf.mxu0
        %v1773 = vpop.f32.mrf.mxu0
        %v1774 = vadd.f32 %v1485, %v1773
        %v1775 = vpop.f32.mrf.mxu0
        %1776 = vmatprep.mubr.bf16.mxu0 %v1275
        %1777 = vmatmul.mubr.bf16.gmra.mxu0 %v900
        %v1778 = vpop.f32.mrf.mxu0
        %v1779 = vadd.f32 %v1490, %v1778
        %v1780 = vpop.f32.mrf.mxu0
        %v1781 = vpop.f32.mrf.mxu0
        %v1782 = vadd.f32 %v1493, %v1781
        %v1783 = vpop.f32.mrf.mxu0
        %1784 = vmatprep.mubr.bf16.mxu0 %v1278
        %1785 = vmatmul.mubr.bf16.gmra.mxu0 %v904
        %v1786 = vpop.f32.mrf.mxu0
        %v1787 = vadd.f32 %v1498, %v1786
        %v1788 = vpop.f32.mrf.mxu0
        %v1789 = vpop.f32.mrf.mxu0
        %v1790 = vadd.f32 %v1501, %v1789
        %v1791 = vpop.f32.mrf.mxu0
        %1792 = vmatprep.mubr.bf16.mxu0 %v1281
        %1793 = vmatmul.mubr.bf16.gmra.mxu0 %v908
        %v1794 = vpop.f32.mrf.mxu0
        %v1795 = vadd.f32 %v1506, %v1794
        %v1796 = vpop.f32.mrf.mxu0
        %v1797 = vpop.f32.mrf.mxu0
        %v1798 = vadd.f32 %v1509, %v1797
        %v1799 = vpop.f32.mrf.mxu0
        %1800 = vmatprep.mubr.bf16.mxu0 %v1284
        %1801 = vmatmul.mubr.bf16.gmra.mxu0 %v912
        %v1802 = vpop.f32.mrf.mxu0
        %v1803 = vadd.f32 %v1514, %v1802
        %v1804 = vpop.f32.mrf.mxu0
        %v1805 = vpop.f32.mrf.mxu0
        %v1806 = vadd.f32 %v1517, %v1805
        %v1807 = vpop.f32.mrf.mxu0
        %1808 = vmatprep.mubr.bf16.mxu0 %v1287
        %1809 = vmatmul.mubr.bf16.gmra.mxu0 %v916
        %v1810 = vpop.f32.mrf.mxu0
        %v1811 = vadd.f32 %v1522, %v1810
        %v1812 = vpop.f32.mrf.mxu0
        %v1813 = vpop.f32.mrf.mxu0
        %v1814 = vadd.f32 %v1525, %v1813
        %v1815 = vpop.f32.mrf.mxu0
        %1816 = vmatprep.mubr.bf16.mxu0 %v1290
        %1817 = vmatmul.mubr.bf16.gmra.mxu0 %v920
        %v1818 = vpop.f32.mrf.mxu0
        %v1819 = vadd.f32 %v1530, %v1818
        %v1820 = vpop.f32.mrf.mxu0
        %v1821 = vpop.f32.mrf.mxu0
        %v1822 = vadd.f32 %v1533, %v1821
        %v1823 = vpop.f32.mrf.mxu0
        %1824 = vmatprep.mubr.bf16.mxu0 %v1293
        %1825 = vmatmul.mubr.bf16.gmra.mxu0 %v924
        %v1826 = vpop.f32.mrf.mxu0
        %v1827 = vadd.f32 %v1538, %v1826
        %v1828 = vpop.f32.mrf.mxu0
        %v1829 = vpop.f32.mrf.mxu0
        %v1830 = vadd.f32 %v1541, %v1829
        %v1831 = vpop.f32.mrf.mxu0
        %1832 = vmatprep.mubr.bf16.mxu0 %v1296
        %1833 = vmatmul.mubr.bf16.gmra.mxu0 %v928
        %v1834 = vpop.f32.mrf.mxu0
        %v1835 = vadd.f32 %v1546, %v1834
        %v1836 = vpop.f32.mrf.mxu0
        %v1837 = vpop.f32.mrf.mxu0
        %v1838 = vadd.f32 %v1549, %v1837
        %v1839 = vpop.f32.mrf.mxu0
        %1840 = vmatprep.mubr.bf16.mxu0 %v1299
        %1841 = vmatmul.mubr.bf16.gmra.mxu0 %v932
        %v1842 = vpop.f32.mrf.mxu0
        %v1843 = vadd.f32 %v1554, %v1842
        %v1844 = vpop.f32.mrf.mxu0
        %v1845 = vpop.f32.mrf.mxu0
        %v1846 = vadd.f32 %v1557, %v1845
        %v1847 = vpop.f32.mrf.mxu0
        %1848 = vmatprep.mubr.bf16.mxu0 %v1302
        %1849 = vmatmul.mubr.bf16.gmra.mxu0 %v936
        %v1850 = vpop.f32.mrf.mxu0
        %v1851 = vadd.f32 %v1562, %v1850
        %v1852 = vpop.f32.mrf.mxu0
        %v1853 = vpop.f32.mrf.mxu0
        %v1854 = vadd.f32 %v1565, %v1853
        %v1855 = vpop.f32.mrf.mxu0
        %1856 = vmatprep.mubr.bf16.mxu0 %v1305
        %1857 = vmatmul.mubr.bf16.gmra.mxu0 %v940
        %v1858 = vpop.f32.mrf.mxu0
        %v1859 = vadd.f32 %v1570, %v1858
        %v1860 = vpop.f32.mrf.mxu0
        %v1861 = vpop.f32.mrf.mxu0
        %v1862 = vadd.f32 %v1573, %v1861
        %v1863 = vpop.f32.mrf.mxu0
        %1864 = vmatprep.mubr.bf16.mxu0 %v1308
        %1865 = vmatmul.mubr.bf16.gmra.mxu0 %v944
        %v1866 = vpop.f32.mrf.mxu0
        %v1867 = vadd.f32 %v1578, %v1866
        %v1868 = vpop.f32.mrf.mxu0
        %v1869 = vpop.f32.mrf.mxu0
        %v1870 = vadd.f32 %v1581, %v1869
        %v1871 = vpop.f32.mrf.mxu0
        %1872 = vmatprep.mubr.bf16.mxu0 %v1311
        %1873 = vmatmul.mubr.bf16.gmra.mxu0 %v948
        %v1874 = vpop.f32.mrf.mxu0
        %v1875 = vadd.f32 %v1586, %v1874
        %v1876 = vpop.f32.mrf.mxu0
        %v1877 = vpop.f32.mrf.mxu0
        %v1878 = vadd.f32 %v1589, %v1877
        %v1879 = vpop.f32.mrf.mxu0
        %1880 = vmatprep.mubr.bf16.mxu0 %v1314
        %1881 = vmatmul.mubr.bf16.gmra.mxu0 %v952
        %v1882 = vpop.f32.mrf.mxu0
        %v1883 = vadd.f32 %v1594, %v1882
        %v1884 = vpop.f32.mrf.mxu0
        %v1885 = vpop.f32.mrf.mxu0
        %v1886 = vadd.f32 %v1597, %v1885
        %v1887 = vpop.f32.mrf.mxu0
        %1888 = vmatprep.mubr.bf16.mxu0 %v1317
        %1889 = vmatmul.mubr.bf16.gmra.mxu0 %v956
        %v1890 = vpop.f32.mrf.mxu0
        %v1891 = vadd.f32 %v1602, %v1890
        %v1892 = vpop.f32.mrf.mxu0
        %v1893 = vpop.f32.mrf.mxu0
        %v1894 = vadd.f32 %v1605, %v1893
        %v1895 = vpop.f32.mrf.mxu0
        %1896 = vdwg.mxu0
        %v1897 = vld [vmem:[%s256] sm:$0x1]
        %v1899 = vlaneseq
        %v1900 = vshrl.u32 %v1899, 7
        %v1901 = vsub.s32 0, %v1900
        %v1902 = vrot.slane %v1897, %v1901
        %v1904 = vmul.f32 %v1643, %v1902
        %v1905 = vmul.f32 %v1646, %v1902
        %v1906 = vmul.f32 %v1651, %v1902
        %v1907 = vmul.f32 %v1654, %v1902
        %v1908 = vmul.f32 %v1659, %v1902
        %v1909 = vmul.f32 %v1662, %v1902
        %v1910 = vmul.f32 %v1667, %v1902
        %v1911 = vmul.f32 %v1670, %v1902
        %v1912 = vmul.f32 %v1675, %v1902
        %v1913 = vmul.f32 %v1678, %v1902
        %v1914 = vmul.f32 %v1683, %v1902
        %v1915 = vmul.f32 %v1686, %v1902
        %v1916 = vmul.f32 %v1691, %v1902
        %v1917 = vmul.f32 %v1694, %v1902
        %v1918 = vmul.f32 %v1699, %v1902
        %v1919 = vmul.f32 %v1702, %v1902
        %v1920 = vmul.f32 %v1707, %v1902
        %v1921 = vmul.f32 %v1710, %v1902
        %v1922 = vmul.f32 %v1715, %v1902
        %v1923 = vmul.f32 %v1718, %v1902
        %v1924 = vmul.f32 %v1723, %v1902
        %v1925 = vmul.f32 %v1726, %v1902
        %v1926 = vmul.f32 %v1731, %v1902
        %v1927 = vmul.f32 %v1734, %v1902
        %v1928 = vmul.f32 %v1739, %v1902
        %v1929 = vmul.f32 %v1742, %v1902
        %v1930 = vmul.f32 %v1747, %v1902
        %v1931 = vmul.f32 %v1750, %v1902
        %v1932 = vmul.f32 %v1755, %v1902
        %v1933 = vmul.f32 %v1758, %v1902
        %v1934 = vmul.f32 %v1763, %v1902
        %v1935 = vmul.f32 %v1766, %v1902
        %v1936 = vmul.f32 %v1771, %v1902
        %v1937 = vmul.f32 %v1774, %v1902
        %v1938 = vmul.f32 %v1779, %v1902
        %v1939 = vmul.f32 %v1782, %v1902
        %v1940 = vmul.f32 %v1787, %v1902
        %v1941 = vmul.f32 %v1790, %v1902
        %v1942 = vmul.f32 %v1795, %v1902
        %v1943 = vmul.f32 %v1798, %v1902
        %v1944 = vmul.f32 %v1803, %v1902
        %v1945 = vmul.f32 %v1806, %v1902
        %v1946 = vmul.f32 %v1811, %v1902
        %v1947 = vmul.f32 %v1814, %v1902
        %v1948 = vmul.f32 %v1819, %v1902
        %v1949 = vmul.f32 %v1822, %v1902
        %v1950 = vmul.f32 %v1827, %v1902
        %v1951 = vmul.f32 %v1830, %v1902
        %v1952 = vmul.f32 %v1835, %v1902
        %v1953 = vmul.f32 %v1838, %v1902
        %v1954 = vmul.f32 %v1843, %v1902
        %v1955 = vmul.f32 %v1846, %v1902
        %v1956 = vmul.f32 %v1851, %v1902
        %v1957 = vmul.f32 %v1854, %v1902
        %v1958 = vmul.f32 %v1859, %v1902
        %v1959 = vmul.f32 %v1862, %v1902
        %v1960 = vmul.f32 %v1867, %v1902
        %v1961 = vmul.f32 %v1870, %v1902
        %v1962 = vmul.f32 %v1875, %v1902
        %v1963 = vmul.f32 %v1878, %v1902
        %v1964 = vmul.f32 %v1883, %v1902
        %v1965 = vmul.f32 %v1886, %v1902
        %v1966 = vmul.f32 %v1891, %v1902
        %v1967 = vmul.f32 %v1894, %v1902
        %v1968 = vld [vmem:[%s259] sm:$0x1]
        %v1970 = vlaneseq
        %v1971 = vshrl.u32 %v1970, 7
        %v1972 = vsub.s32 0, %v1971
        %v1973 = vrot.slane %v1968, %v1972
        %v1975 = vadd.f32 %v1904, %v1973
        %v1976 = vadd.f32 %v1905, %v1973
        %v1977 = vadd.f32 %v1906, %v1973
        %v1978 = vadd.f32 %v1907, %v1973
        %v1979 = vadd.f32 %v1908, %v1973
        %v1980 = vadd.f32 %v1909, %v1973
        %v1981 = vadd.f32 %v1910, %v1973
        %v1982 = vadd.f32 %v1911, %v1973
        %v1983 = vadd.f32 %v1912, %v1973
        %v1984 = vadd.f32 %v1913, %v1973
        %v1985 = vadd.f32 %v1914, %v1973
        %v1986 = vadd.f32 %v1915, %v1973
        %v1987 = vadd.f32 %v1916, %v1973
        %v1988 = vadd.f32 %v1917, %v1973
        %v1989 = vadd.f32 %v1918, %v1973
        %v1990 = vadd.f32 %v1919, %v1973
        %v1991 = vadd.f32 %v1920, %v1973
        %v1992 = vadd.f32 %v1921, %v1973
        %v1993 = vadd.f32 %v1922, %v1973
        %v1994 = vadd.f32 %v1923, %v1973
        %v1995 = vadd.f32 %v1924, %v1973
        %v1996 = vadd.f32 %v1925, %v1973
        %v1997 = vadd.f32 %v1926, %v1973
        %v1998 = vadd.f32 %v1927, %v1973
        %v1999 = vadd.f32 %v1928, %v1973
        %v2000 = vadd.f32 %v1929, %v1973
        %v2001 = vadd.f32 %v1930, %v1973
        %v2002 = vadd.f32 %v1931, %v1973
        %v2003 = vadd.f32 %v1932, %v1973
        %v2004 = vadd.f32 %v1933, %v1973
        %v2005 = vadd.f32 %v1934, %v1973
        %v2006 = vadd.f32 %v1935, %v1973
        %v2007 = vadd.f32 %v1936, %v1973
        %v2008 = vadd.f32 %v1937, %v1973
        %v2009 = vadd.f32 %v1938, %v1973
        %v2010 = vadd.f32 %v1939, %v1973
        %v2011 = vadd.f32 %v1940, %v1973
        %v2012 = vadd.f32 %v1941, %v1973
        %v2013 = vadd.f32 %v1942, %v1973
        %v2014 = vadd.f32 %v1943, %v1973
        %v2015 = vadd.f32 %v1944, %v1973
        %v2016 = vadd.f32 %v1945, %v1973
        %v2017 = vadd.f32 %v1946, %v1973
        %v2018 = vadd.f32 %v1947, %v1973
        %v2019 = vadd.f32 %v1948, %v1973
        %v2020 = vadd.f32 %v1949, %v1973
        %v2021 = vadd.f32 %v1950, %v1973
        %v2022 = vadd.f32 %v1951, %v1973
        %v2023 = vadd.f32 %v1952, %v1973
        %v2024 = vadd.f32 %v1953, %v1973
        %v2025 = vadd.f32 %v1954, %v1973
        %v2026 = vadd.f32 %v1955, %v1973
        %v2027 = vadd.f32 %v1956, %v1973
        %v2028 = vadd.f32 %v1957, %v1973
        %v2029 = vadd.f32 %v1958, %v1973
        %v2030 = vadd.f32 %v1959, %v1973
        %v2031 = vadd.f32 %v1960, %v1973
        %v2032 = vadd.f32 %v1961, %v1973
        %v2033 = vadd.f32 %v1962, %v1973
        %v2034 = vadd.f32 %v1963, %v1973
        %v2035 = vadd.f32 %v1964, %v1973
        %v2036 = vadd.f32 %v1965, %v1973
        %v2037 = vadd.f32 %v1966, %v1973
        %v2038 = vadd.f32 %v1967, %v1973
        %vm2039 = vcmp.ge.f32.partialorder %v1975, 0.0
        %vm2040 = vcmp.ge.f32.partialorder %v1976, 0.0
        %vm2041 = vcmp.ge.f32.partialorder %v1977, 0.0
        %vm2042 = vcmp.ge.f32.partialorder %v1978, 0.0
        %vm2043 = vcmp.ge.f32.partialorder %v1979, 0.0
        %vm2044 = vcmp.ge.f32.partialorder %v1980, 0.0
        %vm2045 = vcmp.ge.f32.partialorder %v1981, 0.0
        %vm2046 = vcmp.ge.f32.partialorder %v1982, 0.0
        %vm2047 = vcmp.ge.f32.partialorder %v1983, 0.0
        %vm2048 = vcmp.ge.f32.partialorder %v1984, 0.0
        %vm2049 = vcmp.ge.f32.partialorder %v1985, 0.0
        %vm2050 = vcmp.ge.f32.partialorder %v1986, 0.0
        %vm2051 = vcmp.ge.f32.partialorder %v1987, 0.0
        %vm2052 = vcmp.ge.f32.partialorder %v1988, 0.0
        %vm2053 = vcmp.ge.f32.partialorder %v1989, 0.0
        %vm2054 = vcmp.ge.f32.partialorder %v1990, 0.0
        %vm2055 = vcmp.ge.f32.partialorder %v1991, 0.0
        %vm2056 = vcmp.ge.f32.partialorder %v1992, 0.0
        %vm2057 = vcmp.ge.f32.partialorder %v1993, 0.0
        %vm2058 = vcmp.ge.f32.partialorder %v1994, 0.0
        %vm2059 = vcmp.ge.f32.partialorder %v1995, 0.0
        %vm2060 = vcmp.ge.f32.partialorder %v1996, 0.0
        %vm2061 = vcmp.ge.f32.partialorder %v1997, 0.0
        %vm2062 = vcmp.ge.f32.partialorder %v1998, 0.0
        %vm2063 = vcmp.ge.f32.partialorder %v1999, 0.0
        %vm2064 = vcmp.ge.f32.partialorder %v2000, 0.0
        %vm2065 = vcmp.ge.f32.partialorder %v2001, 0.0
        %vm2066 = vcmp.ge.f32.partialorder %v2002, 0.0
        %vm2067 = vcmp.ge.f32.partialorder %v2003, 0.0
        %vm2068 = vcmp.ge.f32.partialorder %v2004, 0.0
        %vm2069 = vcmp.ge.f32.partialorder %v2005, 0.0
        %vm2070 = vcmp.ge.f32.partialorder %v2006, 0.0
        %vm2071 = vcmp.ge.f32.partialorder %v2007, 0.0
        %vm2072 = vcmp.ge.f32.partialorder %v2008, 0.0
        %vm2073 = vcmp.ge.f32.partialorder %v2009, 0.0
        %vm2074 = vcmp.ge.f32.partialorder %v2010, 0.0
        %vm2075 = vcmp.ge.f32.partialorder %v2011, 0.0
        %vm2076 = vcmp.ge.f32.partialorder %v2012, 0.0
        %vm2077 = vcmp.ge.f32.partialorder %v2013, 0.0
        %vm2078 = vcmp.ge.f32.partialorder %v2014, 0.0
        %vm2079 = vcmp.ge.f32.partialorder %v2015, 0.0
        %vm2080 = vcmp.ge.f32.partialorder %v2016, 0.0
        %vm2081 = vcmp.ge.f32.partialorder %v2017, 0.0
        %vm2082 = vcmp.ge.f32.partialorder %v2018, 0.0
        %vm2083 = vcmp.ge.f32.partialorder %v2019, 0.0
        %vm2084 = vcmp.ge.f32.partialorder %v2020, 0.0
        %vm2085 = vcmp.ge.f32.partialorder %v2021, 0.0
        %vm2086 = vcmp.ge.f32.partialorder %v2022, 0.0
        %vm2087 = vcmp.ge.f32.partialorder %v2023, 0.0
        %vm2088 = vcmp.ge.f32.partialorder %v2024, 0.0
        %vm2089 = vcmp.ge.f32.partialorder %v2025, 0.0
        %vm2090 = vcmp.ge.f32.partialorder %v2026, 0.0
        %vm2091 = vcmp.ge.f32.partialorder %v2027, 0.0
        %vm2092 = vcmp.ge.f32.partialorder %v2028, 0.0
        %vm2093 = vcmp.ge.f32.partialorder %v2029, 0.0
        %vm2094 = vcmp.ge.f32.partialorder %v2030, 0.0
        %vm2095 = vcmp.ge.f32.partialorder %v2031, 0.0
        %vm2096 = vcmp.ge.f32.partialorder %v2032, 0.0
        %vm2097 = vcmp.ge.f32.partialorder %v2033, 0.0
        %vm2098 = vcmp.ge.f32.partialorder %v2034, 0.0
        %vm2099 = vcmp.ge.f32.partialorder %v2035, 0.0
        %vm2100 = vcmp.ge.f32.partialorder %v2036, 0.0
        %vm2101 = vcmp.ge.f32.partialorder %v2037, 0.0
        %vm2102 = vcmp.ge.f32.partialorder %v2038, 0.0
        %v2103 = vmul.f32 %v1975, 0.1
        %v2104 = vmul.f32 %v1976, 0.1
        %v2105 = vmul.f32 %v1977, 0.1
        %v2106 = vmul.f32 %v1978, 0.1
        %v2107 = vmul.f32 %v1979, 0.1
        %v2108 = vmul.f32 %v1980, 0.1
        %v2109 = vmul.f32 %v1981, 0.1
        %v2110 = vmul.f32 %v1982, 0.1
        %v2111 = vmul.f32 %v1983, 0.1
        %v2112 = vmul.f32 %v1984, 0.1
        %v2113 = vmul.f32 %v1985, 0.1
        %v2114 = vmul.f32 %v1986, 0.1
        %v2115 = vmul.f32 %v1987, 0.1
        %v2116 = vmul.f32 %v1988, 0.1
        %v2117 = vmul.f32 %v1989, 0.1
        %v2118 = vmul.f32 %v1990, 0.1
        %v2119 = vmul.f32 %v1991, 0.1
        %v2120 = vmul.f32 %v1992, 0.1
        %v2121 = vmul.f32 %v1993, 0.1
        %v2122 = vmul.f32 %v1994, 0.1
        %v2123 = vmul.f32 %v1995, 0.1
        %v2124 = vmul.f32 %v1996, 0.1
        %v2125 = vmul.f32 %v1997, 0.1
        %v2126 = vmul.f32 %v1998, 0.1
        %v2127 = vmul.f32 %v1999, 0.1
        %v2128 = vmul.f32 %v2000, 0.1
        %v2129 = vmul.f32 %v2001, 0.1
        %v2130 = vmul.f32 %v2002, 0.1
        %v2131 = vmul.f32 %v2003, 0.1
        %v2132 = vmul.f32 %v2004, 0.1
        %v2133 = vmul.f32 %v2005, 0.1
        %v2134 = vmul.f32 %v2006, 0.1
        %v2135 = vmul.f32 %v2007, 0.1
        %v2136 = vmul.f32 %v2008, 0.1
        %v2137 = vmul.f32 %v2009, 0.1
        %v2138 = vmul.f32 %v2010, 0.1
        %v2139 = vmul.f32 %v2011, 0.1
        %v2140 = vmul.f32 %v2012, 0.1
        %v2141 = vmul.f32 %v2013, 0.1
        %v2142 = vmul.f32 %v2014, 0.1
        %v2143 = vmul.f32 %v2015, 0.1
        %v2144 = vmul.f32 %v2016, 0.1
        %v2145 = vmul.f32 %v2017, 0.1
        %v2146 = vmul.f32 %v2018, 0.1
        %v2147 = vmul.f32 %v2019, 0.1
        %v2148 = vmul.f32 %v2020, 0.1
        %v2149 = vmul.f32 %v2021, 0.1
        %v2150 = vmul.f32 %v2022, 0.1
        %v2151 = vmul.f32 %v2023, 0.1
        %v2152 = vmul.f32 %v2024, 0.1
        %v2153 = vmul.f32 %v2025, 0.1
        %v2154 = vmul.f32 %v2026, 0.1
        %v2155 = vmul.f32 %v2027, 0.1
        %v2156 = vmul.f32 %v2028, 0.1
        %v2157 = vmul.f32 %v2029, 0.1
        %v2158 = vmul.f32 %v2030, 0.1
        %v2159 = vmul.f32 %v2031, 0.1
        %v2160 = vmul.f32 %v2032, 0.1
        %v2161 = vmul.f32 %v2033, 0.1
        %v2162 = vmul.f32 %v2034, 0.1
        %v2163 = vmul.f32 %v2035, 0.1
        %v2164 = vmul.f32 %v2036, 0.1
        %v2165 = vmul.f32 %v2037, 0.1
        %v2166 = vmul.f32 %v2038, 0.1
        %v2167 = vsel %vm2039, %v1975, %v2103
        %v2168 = vsel %vm2040, %v1976, %v2104
        %v2169 = vsel %vm2041, %v1977, %v2105
        %v2170 = vsel %vm2042, %v1978, %v2106
        %v2171 = vsel %vm2043, %v1979, %v2107
        %v2172 = vsel %vm2044, %v1980, %v2108
        %v2173 = vsel %vm2045, %v1981, %v2109
        %v2174 = vsel %vm2046, %v1982, %v2110
        %v2175 = vsel %vm2047, %v1983, %v2111
        %v2176 = vsel %vm2048, %v1984, %v2112
        %v2177 = vsel %vm2049, %v1985, %v2113
        %v2178 = vsel %vm2050, %v1986, %v2114
        %v2179 = vsel %vm2051, %v1987, %v2115
        %v2180 = vsel %vm2052, %v1988, %v2116
        %v2181 = vsel %vm2053, %v1989, %v2117
        %v2182 = vsel %vm2054, %v1990, %v2118
        %v2183 = vsel %vm2055, %v1991, %v2119
        %v2184 = vsel %vm2056, %v1992, %v2120
        %v2185 = vsel %vm2057, %v1993, %v2121
        %v2186 = vsel %vm2058, %v1994, %v2122
        %v2187 = vsel %vm2059, %v1995, %v2123
        %v2188 = vsel %vm2060, %v1996, %v2124
        %v2189 = vsel %vm2061, %v1997, %v2125
        %v2190 = vsel %vm2062, %v1998, %v2126
        %v2191 = vsel %vm2063, %v1999, %v2127
        %v2192 = vsel %vm2064, %v2000, %v2128
        %v2193 = vsel %vm2065, %v2001, %v2129
        %v2194 = vsel %vm2066, %v2002, %v2130
        %v2195 = vsel %vm2067, %v2003, %v2131
        %v2196 = vsel %vm2068, %v2004, %v2132
        %v2197 = vsel %vm2069, %v2005, %v2133
        %v2198 = vsel %vm2070, %v2006, %v2134
        %v2199 = vsel %vm2071, %v2007, %v2135
        %v2200 = vsel %vm2072, %v2008, %v2136
        %v2201 = vsel %vm2073, %v2009, %v2137
        %v2202 = vsel %vm2074, %v2010, %v2138
        %v2203 = vsel %vm2075, %v2011, %v2139
        %v2204 = vsel %vm2076, %v2012, %v2140
        %v2205 = vsel %vm2077, %v2013, %v2141
        %v2206 = vsel %vm2078, %v2014, %v2142
        %v2207 = vsel %vm2079, %v2015, %v2143
        %v2208 = vsel %vm2080, %v2016, %v2144
        %v2209 = vsel %vm2081, %v2017, %v2145
        %v2210 = vsel %vm2082, %v2018, %v2146
        %v2211 = vsel %vm2083, %v2019, %v2147
        %v2212 = vsel %vm2084, %v2020, %v2148
        %v2213 = vsel %vm2085, %v2021, %v2149
        %v2214 = vsel %vm2086, %v2022, %v2150
        %v2215 = vsel %vm2087, %v2023, %v2151
        %v2216 = vsel %vm2088, %v2024, %v2152
        %v2217 = vsel %vm2089, %v2025, %v2153
        %v2218 = vsel %vm2090, %v2026, %v2154
        %v2219 = vsel %vm2091, %v2027, %v2155
        %v2220 = vsel %vm2092, %v2028, %v2156
        %v2221 = vsel %vm2093, %v2029, %v2157
        %v2222 = vsel %vm2094, %v2030, %v2158
        %v2223 = vsel %vm2095, %v2031, %v2159
        %v2224 = vsel %vm2096, %v2032, %v2160
        %v2225 = vsel %vm2097, %v2033, %v2161
        %v2226 = vsel %vm2098, %v2034, %v2162
        %v2227 = vsel %vm2099, %v2035, %v2163
        %v2228 = vsel %vm2100, %v2036, %v2164
        %v2229 = vsel %vm2101, %v2037, %v2165
        %v2230 = vsel %vm2102, %v2038, %v2166
        %v2231 = vpack.c.bf16 %v2168, %v2167
        %v2232 = vpack.c.bf16 %v2170, %v2169
        %v2233 = vpack.c.bf16 %v2172, %v2171
        %v2234 = vpack.c.bf16 %v2174, %v2173
        %v2235 = vpack.c.bf16 %v2176, %v2175
        %v2236 = vpack.c.bf16 %v2178, %v2177
        %v2237 = vpack.c.bf16 %v2180, %v2179
        %v2238 = vpack.c.bf16 %v2182, %v2181
        %v2239 = vpack.c.bf16 %v2184, %v2183
        %v2240 = vpack.c.bf16 %v2186, %v2185
        %v2241 = vpack.c.bf16 %v2188, %v2187
        %v2242 = vpack.c.bf16 %v2190, %v2189
        %v2243 = vpack.c.bf16 %v2192, %v2191
        %v2244 = vpack.c.bf16 %v2194, %v2193
        %v2245 = vpack.c.bf16 %v2196, %v2195
        %v2246 = vpack.c.bf16 %v2198, %v2197
        %v2247 = vpack.c.bf16 %v2200, %v2199
        %v2248 = vpack.c.bf16 %v2202, %v2201
        %v2249 = vpack.c.bf16 %v2204, %v2203
        %v2250 = vpack.c.bf16 %v2206, %v2205
        %v2251 = vpack.c.bf16 %v2208, %v2207
        %v2252 = vpack.c.bf16 %v2210, %v2209
        %v2253 = vpack.c.bf16 %v2212, %v2211
        %v2254 = vpack.c.bf16 %v2214, %v2213
        %v2255 = vpack.c.bf16 %v2216, %v2215
        %v2256 = vpack.c.bf16 %v2218, %v2217
        %v2257 = vpack.c.bf16 %v2220, %v2219
        %v2258 = vpack.c.bf16 %v2222, %v2221
        %v2259 = vpack.c.bf16 %v2224, %v2223
        %v2260 = vpack.c.bf16 %v2226, %v2225
        %v2261 = vpack.c.bf16 %v2228, %v2227
        %v2262 = vpack.c.bf16 %v2230, %v2229
        %v2295 = vunpack.c.l.b16 %v2231
        %v2296 = vunpack.c.h.b16 %v2231
        %v2297 = vunpack.c.l.b16 %v2232
        %v2298 = vunpack.c.h.b16 %v2232
        %v2299 = vunpack.c.l.b16 %v2233
        %v2300 = vunpack.c.h.b16 %v2233
        %v2301 = vunpack.c.l.b16 %v2234
        %v2302 = vunpack.c.h.b16 %v2234
        %v2303 = vunpack.c.l.b16 %v2235
        %v2304 = vunpack.c.h.b16 %v2235
        %v2305 = vunpack.c.l.b16 %v2236
        %v2306 = vunpack.c.h.b16 %v2236
        %v2307 = vunpack.c.l.b16 %v2237
        %v2308 = vunpack.c.h.b16 %v2237
        %v2309 = vunpack.c.l.b16 %v2238
        %v2310 = vunpack.c.h.b16 %v2238
        %v2311 = vunpack.c.l.b16 %v2239
        %v2312 = vunpack.c.h.b16 %v2239
        %v2313 = vunpack.c.l.b16 %v2240
        %v2314 = vunpack.c.h.b16 %v2240
        %v2315 = vunpack.c.l.b16 %v2241
        %v2316 = vunpack.c.h.b16 %v2241
        %v2317 = vunpack.c.l.b16 %v2242
        %v2318 = vunpack.c.h.b16 %v2242
        %v2319 = vunpack.c.l.b16 %v2243
        %v2320 = vunpack.c.h.b16 %v2243
        %v2321 = vunpack.c.l.b16 %v2244
        %v2322 = vunpack.c.h.b16 %v2244
        %v2323 = vunpack.c.l.b16 %v2245
        %v2324 = vunpack.c.h.b16 %v2245
        %v2325 = vunpack.c.l.b16 %v2246
        %v2326 = vunpack.c.h.b16 %v2246
        %v2327 = vunpack.c.l.b16 %v2247
        %v2328 = vunpack.c.h.b16 %v2247
        %v2329 = vunpack.c.l.b16 %v2248
        %v2330 = vunpack.c.h.b16 %v2248
        %v2331 = vunpack.c.l.b16 %v2249
        %v2332 = vunpack.c.h.b16 %v2249
        %v2333 = vunpack.c.l.b16 %v2250
        %v2334 = vunpack.c.h.b16 %v2250
        %v2335 = vunpack.c.l.b16 %v2251
        %v2336 = vunpack.c.h.b16 %v2251
        %v2337 = vunpack.c.l.b16 %v2252
        %v2338 = vunpack.c.h.b16 %v2252
        %v2339 = vunpack.c.l.b16 %v2253
        %v2340 = vunpack.c.h.b16 %v2253
        %v2341 = vunpack.c.l.b16 %v2254
        %v2342 = vunpack.c.h.b16 %v2254
        %v2343 = vunpack.c.l.b16 %v2255
        %v2344 = vunpack.c.h.b16 %v2255
        %v2345 = vunpack.c.l.b16 %v2256
        %v2346 = vunpack.c.h.b16 %v2256
        %v2347 = vunpack.c.l.b16 %v2257
        %v2348 = vunpack.c.h.b16 %v2257
        %v2349 = vunpack.c.l.b16 %v2258
        %v2350 = vunpack.c.h.b16 %v2258
        %v2351 = vunpack.c.l.b16 %v2259
        %v2352 = vunpack.c.h.b16 %v2259
        %v2353 = vunpack.c.l.b16 %v2260
        %v2354 = vunpack.c.h.b16 %v2260
        %v2355 = vunpack.c.l.b16 %v2261
        %v2356 = vunpack.c.h.b16 %v2261
        %v2357 = vunpack.c.l.b16 %v2262
        %v2358 = vunpack.c.h.b16 %v2262
        %v2359 = vpack.c.b16 %v2295, %v2295
        %v2360 = vpack.c.b16 %v2296, %v2296
        %v2361 = vpack.c.b16 %v2297, %v2297
        %v2362 = vpack.c.b16 %v2298, %v2298
        %v2363 = vpack.c.b16 %v2299, %v2299
        %v2364 = vpack.c.b16 %v2300, %v2300
        %v2365 = vpack.c.b16 %v2301, %v2301
        %v2366 = vpack.c.b16 %v2302, %v2302
        %v2367 = vpack.c.b16 %v2303, %v2303
        %v2368 = vpack.c.b16 %v2304, %v2304
        %v2369 = vpack.c.b16 %v2305, %v2305
        %v2370 = vpack.c.b16 %v2306, %v2306
        %v2371 = vpack.c.b16 %v2307, %v2307
        %v2372 = vpack.c.b16 %v2308, %v2308
        %v2373 = vpack.c.b16 %v2309, %v2309
        %v2374 = vpack.c.b16 %v2310, %v2310
        %v2375 = vpack.c.b16 %v2311, %v2311
        %v2376 = vpack.c.b16 %v2312, %v2312
        %v2377 = vpack.c.b16 %v2313, %v2313
        %v2378 = vpack.c.b16 %v2314, %v2314
        %v2379 = vpack.c.b16 %v2315, %v2315
        %v2380 = vpack.c.b16 %v2316, %v2316
        %v2381 = vpack.c.b16 %v2317, %v2317
        %v2382 = vpack.c.b16 %v2318, %v2318
        %v2383 = vpack.c.b16 %v2319, %v2319
        %v2384 = vpack.c.b16 %v2320, %v2320
        %v2385 = vpack.c.b16 %v2321, %v2321
        %v2386 = vpack.c.b16 %v2322, %v2322
        %v2387 = vpack.c.b16 %v2323, %v2323
        %v2388 = vpack.c.b16 %v2324, %v2324
        %v2389 = vpack.c.b16 %v2325, %v2325
        %v2390 = vpack.c.b16 %v2326, %v2326
        %v2391 = vpack.c.b16 %v2327, %v2327
        %v2392 = vpack.c.b16 %v2328, %v2328
        %v2393 = vpack.c.b16 %v2329, %v2329
        %v2394 = vpack.c.b16 %v2330, %v2330
        %v2395 = vpack.c.b16 %v2331, %v2331
        %v2396 = vpack.c.b16 %v2332, %v2332
        %v2397 = vpack.c.b16 %v2333, %v2333
        %v2398 = vpack.c.b16 %v2334, %v2334
        %v2399 = vpack.c.b16 %v2335, %v2335
        %v2400 = vpack.c.b16 %v2336, %v2336
        %v2401 = vpack.c.b16 %v2337, %v2337
        %v2402 = vpack.c.b16 %v2338, %v2338
        %v2403 = vpack.c.b16 %v2339, %v2339
        %v2404 = vpack.c.b16 %v2340, %v2340
        %v2405 = vpack.c.b16 %v2341, %v2341
        %v2406 = vpack.c.b16 %v2342, %v2342
        %v2407 = vpack.c.b16 %v2343, %v2343
        %v2408 = vpack.c.b16 %v2344, %v2344
        %v2409 = vpack.c.b16 %v2345, %v2345
        %v2410 = vpack.c.b16 %v2346, %v2346
        %v2411 = vpack.c.b16 %v2347, %v2347
        %v2412 = vpack.c.b16 %v2348, %v2348
        %v2413 = vpack.c.b16 %v2349, %v2349
        %v2414 = vpack.c.b16 %v2350, %v2350
        %v2415 = vpack.c.b16 %v2351, %v2351
        %v2416 = vpack.c.b16 %v2352, %v2352
        %v2417 = vpack.c.b16 %v2353, %v2353
        %v2418 = vpack.c.b16 %v2354, %v2354
        %v2419 = vpack.c.b16 %v2355, %v2355
        %v2420 = vpack.c.b16 %v2356, %v2356
        %v2421 = vpack.c.b16 %v2357, %v2357
        %v2422 = vpack.c.b16 %v2358, %v2358
        %2487 = vst [vmem:[%s242] sm:$0xf] %v2359
        %2488 = vst [vmem:[%s242 + $0x4] sm:$0xf] %v2360
        %2489 = vst [vmem:[%s242 + $0x8] sm:$0xf] %v2361
        %2490 = vst [vmem:[%s242 + $0xc] sm:$0xf] %v2362
        %2491 = vst [vmem:[%s242 + $0x10] sm:$0xf] %v2363
        %2492 = vst [vmem:[%s242 + $0x14] sm:$0xf] %v2364
        %2493 = vst [vmem:[%s242 + $0x18] sm:$0xf] %v2365
        %2494 = vst [vmem:[%s242 + $0x1c] sm:$0xf] %v2366
        %2495 = vst [vmem:[%s242 + $0x20] sm:$0xf] %v2367
        %2496 = vst [vmem:[%s242 + $0x24] sm:$0xf] %v2368
        %2497 = vst [vmem:[%s242 + $0x28] sm:$0xf] %v2369
        %2498 = vst [vmem:[%s242 + $0x2c] sm:$0xf] %v2370
        %2499 = vst [vmem:[%s242 + $0x30] sm:$0xf] %v2371
        %2500 = vst [vmem:[%s242 + $0x34] sm:$0xf] %v2372
        %2501 = vst [vmem:[%s242 + $0x38] sm:$0xf] %v2373
        %2502 = vst [vmem:[%s242 + $0x3c] sm:$0xf] %v2374
        %2503 = vst [vmem:[%s242 + $0x40] sm:$0xf] %v2375
        %2504 = vst [vmem:[%s242 + $0x44] sm:$0xf] %v2376
        %2505 = vst [vmem:[%s242 + $0x48] sm:$0xf] %v2377
        %2506 = vst [vmem:[%s242 + $0x4c] sm:$0xf] %v2378
        %2507 = vst [vmem:[%s242 + $0x50] sm:$0xf] %v2379
        %2508 = vst [vmem:[%s242 + $0x54] sm:$0xf] %v2380
        %2509 = vst [vmem:[%s242 + $0x58] sm:$0xf] %v2381
        %2510 = vst [vmem:[%s242 + $0x5c] sm:$0xf] %v2382
        %2511 = vst [vmem:[%s242 + $0x60] sm:$0xf] %v2383
        %2512 = vst [vmem:[%s242 + $0x64] sm:$0xf] %v2384
        %2513 = vst [vmem:[%s242 + $0x68] sm:$0xf] %v2385
        %2514 = vst [vmem:[%s242 + $0x6c] sm:$0xf] %v2386
        %2515 = vst [vmem:[%s242 + $0x70] sm:$0xf] %v2387
        %2516 = vst [vmem:[%s242 + $0x74] sm:$0xf] %v2388
        %2517 = vst [vmem:[%s242 + $0x78] sm:$0xf] %v2389
        %2518 = vst [vmem:[%s242 + $0x7c] sm:$0xf] %v2390
        %2519 = vst [vmem:[%s242 + $0x80] sm:$0xf] %v2391
        %2520 = vst [vmem:[%s242 + $0x84] sm:$0xf] %v2392
        %2521 = vst [vmem:[%s242 + $0x88] sm:$0xf] %v2393
        %2522 = vst [vmem:[%s242 + $0x8c] sm:$0xf] %v2394
        %2523 = vst [vmem:[%s242 + $0x90] sm:$0xf] %v2395
        %2524 = vst [vmem:[%s242 + $0x94] sm:$0xf] %v2396
        %2525 = vst [vmem:[%s242 + $0x98] sm:$0xf] %v2397
        %2526 = vst [vmem:[%s242 + $0x9c] sm:$0xf] %v2398
        %2527 = vst [vmem:[%s242 + $0xa0] sm:$0xf] %v2399
        %2528 = vst [vmem:[%s242 + $0xa4] sm:$0xf] %v2400
        %2529 = vst [vmem:[%s242 + $0xa8] sm:$0xf] %v2401
        %2530 = vst [vmem:[%s242 + $0xac] sm:$0xf] %v2402
        %2531 = vst [vmem:[%s242 + $0xb0] sm:$0xf] %v2403
        %2532 = vst [vmem:[%s242 + $0xb4] sm:$0xf] %v2404
        %2533 = vst [vmem:[%s242 + $0xb8] sm:$0xf] %v2405
        %2534 = vst [vmem:[%s242 + $0xbc] sm:$0xf] %v2406
        %2535 = vst [vmem:[%s242 + $0xc0] sm:$0xf] %v2407
        %2536 = vst [vmem:[%s242 + $0xc4] sm:$0xf] %v2408
        %2537 = vst [vmem:[%s242 + $0xc8] sm:$0xf] %v2409
        %2538 = vst [vmem:[%s242 + $0xcc] sm:$0xf] %v2410
        %2539 = vst [vmem:[%s242 + $0xd0] sm:$0xf] %v2411
        %2540 = vst [vmem:[%s242 + $0xd4] sm:$0xf] %v2412
        %2541 = vst [vmem:[%s242 + $0xd8] sm:$0xf] %v2413
        %2542 = vst [vmem:[%s242 + $0xdc] sm:$0xf] %v2414
        %2543 = vst [vmem:[%s242 + $0xe0] sm:$0xf] %v2415
        %2544 = vst [vmem:[%s242 + $0xe4] sm:$0xf] %v2416
        %2545 = vst [vmem:[%s242 + $0xe8] sm:$0xf] %v2417
        %2546 = vst [vmem:[%s242 + $0xec] sm:$0xf] %v2418
        %2547 = vst [vmem:[%s242 + $0xf0] sm:$0xf] %v2419
        %2548 = vst [vmem:[%s242 + $0xf4] sm:$0xf] %v2420
        %2549 = vst [vmem:[%s242 + $0xf8] sm:$0xf] %v2421
        %2550 = vst [vmem:[%s242 + $0xfc] sm:$0xf] %v2422
        %s2551 = sand.u32 %s144, 1
        %s2552 = scalar_lea.sflag [#allocation3], %s2551
        %s2553 = sand.u32 %s144, 1
        %s2554 = smul.addr %s2553, 256
        %s2555 = scalar_lea.vmem [#allocation2], %s2554
        // Predicated region
        $region37: #{tpu_custom_call.1} parent=35 // pred_check
          %p2556 = pneg %p154
        $region38: #{tpu_custom_call.1} parent=35 // pred_check_branch
          %2558 = sbr.rel (%p2556) target = $region40
        $region39: #{tpu_custom_call.1} parent=35 // pred_region
          %s2559 = smul.u32 64, %s22
          %s2561 = ssub.s32 4096, 4096
          %2562 = vsyncadd %s2552, %s2561
          %s2563 = sadd.s32 %s23, %s2559
          %s2564 = smul.addr %s2563, 64
          %s2565 = scalar_lea.hbm %s4, %s2564
          %s2566 = sshll.u32 %s2555, 4
          %s2567 = int_to_ptr.vmem [resolvable:$true] %s2566
          %2572 = dma.vmem_to_hbm [thread:$0]  %s2567, 4096, %s2565, %s2552, 64, 64, 4
        $region40: #{tpu_custom_call.1} parent=35 // pred_fallthru
          _
      $region36: #{tpu_custom_call.1} parent=5 // pred_fallthru
        _
      %p2573 = scmp.le.s32.totalorder 2, %s13
      // Predicated region
      $region41: #{tpu_custom_call.1} parent=5 // pred_check
        %p2574 = pneg %p2573
      $region42: #{tpu_custom_call.1} parent=5 // pred_check_branch
        %2576 = sbr.rel (%p2574) target = $region44
      $region43: #{tpu_custom_call.1} parent=5 // pred_region
        %s2577 = ssub.s32 %s13, 2
        // Predicated region
        $region45: #{tpu_custom_call.1} parent=43 // pred_check
          %p2578 = pneg %p160
        $region46: #{tpu_custom_call.1} parent=43 // pred_check_branch
          %2580 = sbr.rel (%p2578) target = $region48
        $region47: #{tpu_custom_call.1} parent=43 // pred_region
          %s2581 = sand.u32 %s145, 1
          %s2582 = scalar_lea.sflag [#allocation3], %s2581
          %s2583 = sand.u32 %s145, 1
          %s2584 = smul.addr %s2583, 256
          %s2585 = scalar_lea.vmem [#allocation2], %s2584
          %2586 = dma.done %s2582, 4096
        $region48: #{tpu_custom_call.1} parent=43 // pred_fallthru
          _
      $region44: #{tpu_custom_call.1} parent=5 // pred_fallthru
        _
    $region6: #{tpu_custom_call.1} parent=1 // loop_footer
      %s17 = sadd.s32 1, %s13
    $region7: #{tpu_custom_call.1} parent=1 // loop_footer_branch
      %12 = sbr.rel target = $region3
    $region8: #{tpu_custom_call.1} parent=1 // loop_exit
      _
    %2587 = vsyncpa [#allocation3], 1
    %s2588 = scalar_lea.sflag [#allocation3], 1
    %2589 = vsyncpa %s2588, 1

</llo_original>
